<compile_context>
chip_gen: v5e
topology: v5e:2x2
jax: 0.10.0
libtpu: 0.0.40
codegen_flags: <defaults>
</compile_context>

<pallas_src>
import math
from functools import partial

import jax
import jax.numpy as jnp
from jax import lax
from jax.experimental import pallas as pl
from jax.experimental.pallas import tpu as pltpu

_LN_EPS = 1e-5
_ROW_TILE = 256  # TODO(synk): re-derive per-generation (v7x has 64 MiB VMEM) for big models.


def _row_tile(M):
    # Full slab if it is small, otherwise stream 256-row tiles (multiple of 8).
    return M if M <= _ROW_TILE else _ROW_TILE


# ---------------------------- Pallas kernels ----------------------------

def _linear_kernel(x_ref, w_ref, b_ref, o_ref):
    x = x_ref[...].astype(jnp.bfloat16)
    w = w_ref[...].astype(jnp.bfloat16)
    o_ref[...] = jnp.dot(x, w, preferred_element_type=jnp.float32) + b_ref[...]


def linear(x, w, b):
    # x: (M, Din), w: (Din, Dout), b: (1, Dout) -> (M, Dout)
    M, Din = x.shape
    Dout = w.shape[1]
    tm = _row_tile(M)
    return pl.pallas_call(
        _linear_kernel,
        out_shape=jax.ShapeDtypeStruct((M, Dout), jnp.float32),
        grid=(pl.cdiv(M, tm),),
        in_specs=[pl.BlockSpec((tm, Din), lambda i: (i, 0)),
                  pl.BlockSpec((Din, Dout), lambda i: (0, 0)),
                  pl.BlockSpec((1, Dout), lambda i: (0, 0))],
        out_specs=pl.BlockSpec((tm, Dout), lambda i: (i, 0)),
        compiler_params=pltpu.CompilerParams(
            dimension_semantics=("parallel",)),
    )(x, w, b)


def _layernorm(z, g, b):
    mu = jnp.mean(z, axis=-1, keepdims=True)
    var = jnp.mean(jnp.square(z - mu), axis=-1, keepdims=True)
    return (z - mu) * lax.rsqrt(var + _LN_EPS) * g + b


def _proj_add_ln_kernel(res_ref, a_ref, w_ref, b_ref, g_ref, bt_ref, o_ref):
    # norm(res + a @ W + b)  -- attention output projection fused w/ post-norm.
    y = jnp.dot(a_ref[...].astype(jnp.bfloat16),
                w_ref[...].astype(jnp.bfloat16),
                preferred_element_type=jnp.float32) + b_ref[...]
    o_ref[...] = _layernorm(res_ref[...] + y, g_ref[...], bt_ref[...])


def proj_add_ln(x, a, wo, bo, gamma, beta):
    # x: (B, S, D) residual, a: (B*S, D) concatenated heads
    B, S, D = x.shape
    M = B * S
    tm = _row_tile(M)
    out = pl.pallas_call(
        _proj_add_ln_kernel,
        out_shape=jax.ShapeDtypeStruct((M, D), jnp.float32),
        grid=(pl.cdiv(M, tm),),
        in_specs=[pl.BlockSpec((tm, D), lambda i: (i, 0)),
                  pl.BlockSpec((tm, D), lambda i: (i, 0)),
                  pl.BlockSpec((D, D), lambda i: (0, 0)),
                  pl.BlockSpec((1, D), lambda i: (0, 0)),
                  pl.BlockSpec((1, D), lambda i: (0, 0)),
                  pl.BlockSpec((1, D), lambda i: (0, 0))],
        out_specs=pl.BlockSpec((tm, D), lambda i: (i, 0)),
        compiler_params=pltpu.CompilerParams(
            dimension_semantics=("parallel",)),
    )(x.reshape(M, D), a, wo, bo, gamma, beta)
    return out.reshape(B, S, D)


def _ffn_add_ln_kernel(x_ref, w1_ref, b1_ref, w2_ref, b2_ref, g_ref, bt_ref, o_ref):
    # norm(x + l2(relu(l1(x))))  -- fused FFN + residual + post-norm.
    x = x_ref[...]
    h = jnp.dot(x.astype(jnp.bfloat16), w1_ref[...].astype(jnp.bfloat16),
                preferred_element_type=jnp.float32) + b1_ref[...]
    h = jnp.maximum(h, 0.0)
    y = jnp.dot(h.astype(jnp.bfloat16), w2_ref[...].astype(jnp.bfloat16),
                preferred_element_type=jnp.float32) + b2_ref[...]
    o_ref[...] = _layernorm(x + y, g_ref[...], bt_ref[...])


def ffn_add_ln(x, w1, b1, w2, b2, gamma, beta):
    B, S, D = x.shape
    M = B * S
    Dff = w1.shape[1]
    tm = _row_tile(M)
    out = pl.pallas_call(
        _ffn_add_ln_kernel,
        out_shape=jax.ShapeDtypeStruct((M, D), jnp.float32),
        grid=(pl.cdiv(M, tm),),
        in_specs=[pl.BlockSpec((tm, D), lambda i: (i, 0)),
                  pl.BlockSpec((D, Dff), lambda i: (0, 0)),
                  pl.BlockSpec((1, Dff), lambda i: (0, 0)),
                  pl.BlockSpec((Dff, D), lambda i: (0, 0)),
                  pl.BlockSpec((1, D), lambda i: (0, 0)),
                  pl.BlockSpec((1, D), lambda i: (0, 0)),
                  pl.BlockSpec((1, D), lambda i: (0, 0))],
        out_specs=pl.BlockSpec((tm, D), lambda i: (i, 0)),
        compiler_params=pltpu.CompilerParams(
            dimension_semantics=("parallel",)),
    )(x.reshape(M, D), w1, b1, w2, b2, gamma, beta)
    return out.reshape(B, S, D)


def _attn_kernel(q_ref, k_ref, v_ref, m_ref, o_ref, *, scale):
    q = q_ref[0].astype(jnp.bfloat16)              # (Sq, dk)
    k = k_ref[0].astype(jnp.bfloat16)              # (Sk, dk)
    s = lax.dot_general(q, k, (((1,), (1,)), ((), ())),
                        preferred_element_type=jnp.float32) * scale
    # masked_fill(mask == 0, -inf) -> large finite negative (NaN-safe).
    s = jnp.where(m_ref[0] == 0.0, -1e30, s)
    s = s - jnp.max(s, axis=-1, keepdims=True)
    e = jnp.exp(s)
    p = e * pl.reciprocal(jnp.sum(e, axis=-1, keepdims=True), approx=True)
    o_ref[0] = jnp.dot(p.astype(jnp.bfloat16), v_ref[0].astype(jnp.bfloat16),
                       preferred_element_type=jnp.float32)


def attention(q, k, v, mask_b, h, dim_k):
    # q: (B*h, Sq, dk), k/v: (B*h, Sk, dk), mask_b: (B, Sq, Sk) shared by heads
    BH, Sq, dk = q.shape
    Sk = k.shape[1]
    B = BH // h
    scale = 1.0 / math.sqrt(dim_k)
    return pl.pallas_call(
        partial(_attn_kernel, scale=scale),
        out_shape=jax.ShapeDtypeStruct((BH, Sq, dk), jnp.float32),
        grid=(B, h),
        in_specs=[pl.BlockSpec((1, Sq, dk), lambda b, hi: (b * h + hi, 0, 0)),
                  pl.BlockSpec((1, Sk, dk), lambda b, hi: (b * h + hi, 0, 0)),
                  pl.BlockSpec((1, Sk, dk), lambda b, hi: (b * h + hi, 0, 0)),
                  pl.BlockSpec((1, Sq, Sk), lambda b, hi: (b, 0, 0))],
        out_specs=pl.BlockSpec((1, Sq, dk), lambda b, hi: (b * h + hi, 0, 0)),
        compiler_params=pltpu.CompilerParams(
            dimension_semantics=("parallel", "parallel")),
    )(q, k, v, mask_b)


def _gen_kernel(x_ref, w_ref, b_ref, o_ref):
    s = jnp.dot(x_ref[...].astype(jnp.bfloat16), w_ref[...].astype(jnp.bfloat16),
                preferred_element_type=jnp.float32) + b_ref[...]
    s = s - jnp.max(s, axis=-1, keepdims=True)
    e = jnp.exp(s)
    o_ref[...] = e / jnp.sum(e, axis=-1, keepdims=True)   # exact normalize


def generator(x, w, b):
    # softmax(x @ w + b, axis=-1), row-tiled over M.
    # TODO(synk): for large vocabularies also tile V with an online softmax.
    M, D = x.shape
    V = w.shape[1]
    tm = _row_tile(M)
    return pl.pallas_call(
        _gen_kernel,
        out_shape=jax.ShapeDtypeStruct((M, V), jnp.float32),
        grid=(pl.cdiv(M, tm),),
        in_specs=[pl.BlockSpec((tm, D), lambda i: (i, 0)),
                  pl.BlockSpec((D, V), lambda i: (0, 0)),
                  pl.BlockSpec((1, V), lambda i: (0, 0))],
        out_specs=pl.BlockSpec((tm, V), lambda i: (i, 0)),
        compiler_params=pltpu.CompilerParams(
            dimension_semantics=("parallel",)),
    )(x, w, b)


# ---------------------------- model (JAX glue) ----------------------------

def mha_core(p, xq, xk, xv, mask, h, dim_k):
    """Multi-head attention up to (but not including) the output projection.

    Returns the concatenated-head output of shape (B*Sq, h*dim_k).  Reproduces
    the reference bug: q, k and v are all projected with self.lv.
    """
    B, Sq, D = xq.shape
    Sk = xk.shape[1]
    xq_flat = xq.reshape(B * Sq, D)

    if (xk is xq) and (xv is xq):
        # Self-attention: identical input + identical weight -> one projection.
        qp = linear(xq_flat, p["wv"], p["bv"])
        kp = vp = qp
    else:
        # Cross-attention: project [q; memory] in one fused call, reuse k for v.
        xk_flat = xk.reshape(B * Sk, D)
        both = linear(jnp.concatenate([xq_flat, xk_flat], axis=0),
                      p["wv"], p["bv"])
        qp = both[:B * Sq]
        kp = both[B * Sq:]
        vp = kp if (xv is xk) else linear(xv.reshape(B * Sk, D), p["wv"], p["bv"])

    def heads(y, S):
        # TODO(synk): head split/merge still uses XLA transposes between kernels.
        return y.reshape(B, S, h, dim_k).transpose(0, 2, 1, 3).reshape(B * h, S, dim_k)

    q, k, v = heads(qp, Sq), heads(kp, Sk), heads(vp, Sk)

    if mask is None:
        mask_b = jnp.ones((B, Sq, Sk), jnp.float32)
    else:
        m = mask.astype(jnp.float32)
        if m.ndim == 4:
            m = m[:, 0]                   # reference masks have a singleton head dim
        mask_b = jnp.broadcast_to(m, (B, Sq, Sk))

    o = attention(q, k, v, mask_b, h, dim_k)          # (B*h, Sq, dk)
    return o.reshape(B, h, Sq, dim_k).transpose(0, 2, 1, 3).reshape(B * Sq, h * dim_k)


def encoder_forward(layers, x, mask, h, dim_k):
    for p in layers:
        a = mha_core(p["att"], x, x, x, mask, h, dim_k)
        x = proj_add_ln(x, a, p["att"]["wo"], p["att"]["bo"],
                        p["att_ln_g"], p["att_ln_b"])
        x = ffn_add_ln(x, p["ff_w1"], p["ff_b1"], p["ff_w2"], p["ff_b2"],
                       p["ff_ln_g"], p["ff_ln_b"])
    return x


def decoder_forward(layers, x, memory, tgt_mask, src_mask, h, dim_k):
    for p in layers:
        # self-attention over x with tgt_mask (matches Decoder.forward: src_att(x, tgt_mask))
        a = mha_core(p["src_att"], x, x, x, tgt_mask, h, dim_k)
        x = proj_add_ln(x, a, p["src_att"]["wo"], p["src_att"]["bo"],
                        p["src_ln_g"], p["src_ln_b"])
        # cross-attention over encoder memory with src_mask
        a = mha_core(p["tgt_att"], x, memory, memory, src_mask, h, dim_k)
        x = proj_add_ln(x, a, p["tgt_att"]["wo"], p["tgt_att"]["bo"],
                        p["tgt_ln_g"], p["tgt_ln_b"])
        x = ffn_add_ln(x, p["ff_w1"], p["ff_b1"], p["ff_w2"], p["ff_b2"],
                       p["ff_ln_g"], p["ff_ln_b"])
    return x


def encdec_forward(params, src, tgt, src_mask, tgt_mask, *, h, dim_k, dim_model):
    # --- encode ---
    src_x = params["src_emb"][src] + math.sqrt(dim_model)   # Embedding.forward uses '+'
    src_x = src_x + params["pe"][:, :src.shape[1]]
    memory = encoder_forward(params["enc_layers"], src_x, src_mask, h, dim_k)
    # --- decode ---
    tgt_x = params["tgt_emb"][tgt] + math.sqrt(dim_model)
    tgt_x = tgt_x + params["pe"][:, :tgt.shape[1]]
    x = decoder_forward(params["dec_layers"], tgt_x, memory, tgt_mask, src_mask, h, dim_k)
    # --- generator ---
    B, St, D = x.shape
    probs = generator(x.reshape(B * St, D), params["gen_w"], params["gen_b"])
    return probs.reshape(B, St, -1)


# ---------------------------- deterministic init ----------------------------

def make_pe(max_len, dim_model):
    pos = jnp.arange(max_len, dtype=jnp.float32)[:, None]
    denom = jnp.exp(jnp.arange(0, dim_model, 2, dtype=jnp.float32)
                    * (-math.log(10000.0) / dim_model))
    pe = jnp.zeros((max_len, dim_model), jnp.float32)
    pe = pe.at[:, 0::2].set(jnp.sin(pos * denom))
    pe = pe.at[:, 1::2].set(jnp.cos(pos * denom))
    return pe[None]                                          # (1, max_len, D)


def init_params(key, *, src_vocab, tgt_vocab, N, dim_model, d_ff, max_len=64):
    keys = jax.random.split(key, 64)
    ki = iter(keys)

    def lin(din, dout):
        w = jax.random.normal(next(ki), (din, dout), jnp.float32) * 0.05
        return w, jnp.zeros((1, dout), jnp.float32)

    def mha_params():
        wv, bv = lin(dim_model, dim_model)
        wo, bo = lin(dim_model, dim_model)
        return {"wv": wv, "bv": bv, "wo": wo, "bo": bo}

    def ln():
        return (jnp.ones((1, dim_model), jnp.float32),
                jnp.zeros((1, dim_model), jnp.float32))

    enc_layers = []
    for _ in range(N):
        g1, b1 = ln()
        g2, b2 = ln()
        w1, bb1 = lin(dim_model, d_ff)
        w2, bb2 = lin(d_ff, dim_model)
        enc_layers.append({"att": mha_params(), "att_ln_g": g1, "att_ln_b": b1,
                           "ff_w1": w1, "ff_b1": bb1, "ff_w2": w2, "ff_b2": bb2,
                           "ff_ln_g": g2, "ff_ln_b": b2})

    dec_layers = []
    for _ in range(N):
        g1, b1 = ln()
        g2, b2 = ln()
        g3, b3 = ln()
        w1, bb1 = lin(dim_model, d_ff)
        w2, bb2 = lin(d_ff, dim_model)
        dec_layers.append({"src_att": mha_params(), "src_ln_g": g1, "src_ln_b": b1,
                           "tgt_att": mha_params(), "tgt_ln_g": g2, "tgt_ln_b": b2,
                           "ff_w1": w1, "ff_b1": bb1, "ff_w2": w2, "ff_b2": bb2,
                           "ff_ln_g": g3, "ff_ln_b": b3})

    gen_w, gen_b = lin(dim_model, tgt_vocab)
    src_emb = jax.random.normal(next(ki), (src_vocab, dim_model), jnp.float32) * 0.05
    tgt_emb = jax.random.normal(next(ki), (tgt_vocab, dim_model), jnp.float32) * 0.05

    return {"enc_layers": enc_layers, "dec_layers": dec_layers,
            "gen_w": gen_w, "gen_b": gen_b,
            "src_emb": src_emb, "tgt_emb": tgt_emb,
            "pe": make_pe(max_len, dim_model)}


# ---------------------------- demo ----------------------------

if __name__ == "__main__":
    SRC_VOCAB = 50
    TGT_VOCAB = 50
    N = 2            # number of encoder / decoder layers
    DIM = 32         # model dim
    DFF = 64         # feed-forward inner dim
    H = 4            # heads
    DK = DIM // H
    B = 2
    S_SRC = 8
    S_TGT = 8

    key = jax.random.PRNGKey(0)
    kp, ks, kt = jax.random.split(key, 3)
    params = init_params(kp, src_vocab=SRC_VOCAB, tgt_vocab=TGT_VOCAB,
                         N=N, dim_model=DIM, d_ff=DFF)

    src = jax.random.randint(ks, (B, S_SRC), 0, SRC_VOCAB)
    tgt = jax.random.randint(kt, (B, S_TGT), 0, TGT_VOCAB)

    # src_mask: (B, 1, 1, S_src) padding mask (second example: last 2 tokens padded)
    src_mask = jnp.ones((B, 1, 1, S_SRC), jnp.float32)
    src_mask = src_mask.at[1, 0, 0, -2:].set(0.0)
    # tgt_mask: (1, 1, S_tgt, S_tgt) causal (subsequent) mask
    tgt_mask = jnp.tril(jnp.ones((S_TGT, S_TGT), jnp.float32))[None, None]

    fwd = jax.jit(partial(encdec_forward, h=H, dim_k=DK, dim_model=DIM))
    probs = jax.block_until_ready(fwd(params, src, tgt, src_mask, tgt_mask))

    assert probs.shape == (B, S_TGT, TGT_VOCAB)
    assert bool(jnp.all(jnp.isfinite(probs)))
    assert bool(jnp.allclose(jnp.sum(probs, axis=-1), 1.0, atol=1e-4))
    # TODO(synk): `translate()` greedy-decoding loop not implemented (only forward() required).
    print("KERNEL_OK")
</pallas_src>

<mosaic_0001>
module attributes {stable_mosaic.version = 11 : i64} {
  func.func @_linear_kernel(%arg0: i32, %arg1: memref<16x32xf32, #tpu.memory_space<vmem>>, %arg2: memref<32x32xf32, #tpu.memory_space<vmem>>, %arg3: memref<1x32xf32, #tpu.memory_space<vmem>>, %arg4: memref<16x32xf32, #tpu.memory_space<vmem>>) attributes {dimension_semantics = [#tpu.dimension_semantics<parallel>], iteration_bounds = array<i64: 1>, scalar_prefetch = 0 : i64, scratch_operands = 0 : i64, tpu.core_type = #tpu.core_type<tc>, window_params = [{transform_indices = @transform_0, window_bounds = array<i64: 16, 32>}, {pipeline_mode = #tpu.pipeline_mode<synchronous>, transform_indices = @transform_1, window_bounds = array<i64: 32, 32>}, {pipeline_mode = #tpu.pipeline_mode<synchronous>, transform_indices = @transform_2, window_bounds = array<i64: 1, 32>}, {transform_indices = @transform_3, window_bounds = array<i64: 16, 32>}]} {
    %c0 = arith.constant 0 : index
    %c0_0 = arith.constant 0 : index
    %0 = vector.load %arg1[%c0, %c0_0] : memref<16x32xf32, #tpu.memory_space<vmem>>, vector<16x32xf32>
    %1 = arith.truncf %0 : vector<16x32xf32> to vector<16x32xbf16>
    %c0_1 = arith.constant 0 : index
    %c0_2 = arith.constant 0 : index
    %2 = vector.load %arg2[%c0_1, %c0_2] : memref<32x32xf32, #tpu.memory_space<vmem>>, vector<32x32xf32>
    %3 = arith.truncf %2 : vector<32x32xf32> to vector<32x32xbf16>
    %cst = arith.constant dense<0.000000e+00> : vector<16x32xf32>
    %4 = tpu.matmul %1, %3, %cst {dimension_numbers = #tpu.dot_dimension_numbers<[1], [0], [0], [1], [0, 0, 1, 1], [], []>} : vector<16x32xbf16>, vector<32x32xbf16>, vector<16x32xf32> -> vector<16x32xf32>
    %c0_3 = arith.constant 0 : index
    %c0_4 = arith.constant 0 : index
    %5 = vector.load %arg3[%c0_3, %c0_4] : memref<1x32xf32, #tpu.memory_space<vmem>>, vector<1x32xf32>
    %6 = vector.broadcast %5 : vector<1x32xf32> to vector<16x32xf32>
    %7 = arith.addf %4, %6 : vector<16x32xf32>
    %c0_5 = arith.constant 0 : index
    %c0_6 = arith.constant 0 : index
    %8 = vector.load %arg4[%c0_5, %c0_6] : memref<16x32xf32, #tpu.memory_space<vmem>>, vector<16x32xf32>
    tpu.vector_store %arg4[%c0_5, %c0_6], %7 {strides = array<i32>} : memref<16x32xf32, #tpu.memory_space<vmem>>, vector<16x32xf32>,
    return
  }
  func.func @transform_0(%arg0: i32) -> (i32, i32) {
    %c0_i32 = arith.constant 0 : i32
    %c0_i32_0 = arith.constant 0 : i32
    return %arg0, %c0_i32 : i32, i32
  }
  func.func @transform_1(%arg0: i32) -> (i32, i32) {
    %c0_i32 = arith.constant 0 : i32
    %c0_i32_0 = arith.constant 0 : i32
    %c0_i32_1 = arith.constant 0 : i32
    return %c0_i32, %c0_i32_0 : i32, i32
  }
  func.func @transform_2(%arg0: i32) -> (i32, i32) {
    %c0_i32 = arith.constant 0 : i32
    %c0_i32_0 = arith.constant 0 : i32
    %c0_i32_1 = arith.constant 0 : i32
    return %c0_i32, %c0_i32_0 : i32, i32
  }
  func.func @transform_3(%arg0: i32) -> (i32, i32) {
    %c0_i32 = arith.constant 0 : i32
    %c0_i32_0 = arith.constant 0 : i32
    return %arg0, %c0_i32 : i32, i32
  }
}

module attributes {stable_mosaic.version = 11 : i64} {
  func.func @_attn_kernel(%arg0: i32, %arg1: i32, %arg2: memref<1x8x8xf32, #tpu.memory_space<vmem>>, %arg3: memref<1x8x8xf32, #tpu.memory_space<vmem>>, %arg4: memref<1x8x8xf32, #tpu.memory_space<vmem>>, %arg5: memref<1x8x8xf32, #tpu.memory_space<vmem>>, %arg6: memref<1x8x8xf32, #tpu.memory_space<vmem>>) attributes {dimension_semantics = [#tpu.dimension_semantics<parallel>, #tpu.dimension_semantics<parallel>], iteration_bounds = array<i64: 2, 4>, scalar_prefetch = 0 : i64, scratch_operands = 0 : i64, tpu.core_type = #tpu.core_type<tc>, window_params = [{transform_indices = @transform_0, window_bounds = array<i64: 1, 8, 8>}, {transform_indices = @transform_1, window_bounds = array<i64: 1, 8, 8>}, {transform_indices = @transform_2, window_bounds = array<i64: 1, 8, 8>}, {transform_indices = @transform_3, window_bounds = array<i64: 1, 8, 8>}, {transform_indices = @transform_4, window_bounds = array<i64: 1, 8, 8>}]} {
    %c0 = arith.constant 0 : index
    %c0_0 = arith.constant 0 : index
    %c0_1 = arith.constant 0 : index
    %0 = vector.load %arg2[%c0, %c0_0, %c0_1] : memref<1x8x8xf32, #tpu.memory_space<vmem>>, vector<1x8x8xf32>
    %1 = vector.shape_cast %0 : vector<1x8x8xf32> to vector<8x8xf32>
    %2 = arith.truncf %1 : vector<8x8xf32> to vector<8x8xbf16>
    %c0_2 = arith.constant 0 : index
    %c0_3 = arith.constant 0 : index
    %c0_4 = arith.constant 0 : index
    %3 = vector.load %arg3[%c0_2, %c0_3, %c0_4] : memref<1x8x8xf32, #tpu.memory_space<vmem>>, vector<1x8x8xf32>
    %4 = vector.shape_cast %3 : vector<1x8x8xf32> to vector<8x8xf32>
    %5 = arith.truncf %4 : vector<8x8xf32> to vector<8x8xbf16>
    %cst = arith.constant dense<0.000000e+00> : vector<8x8xf32>
    %6 = tpu.matmul %2, %5, %cst {dimension_numbers = #tpu.dot_dimension_numbers<[1], [1], [0], [0], [0, 0, 1, 0], [], []>} : vector<8x8xbf16>, vector<8x8xbf16>, vector<8x8xf32> -> vector<8x8xf32>
    %cst_5 = arith.constant 0.353553385 : f32
    %7 = vector.broadcast %cst_5 : f32 to vector<8x8xf32>
    %8 = arith.mulf %6, %7 : vector<8x8xf32>
    %c0_6 = arith.constant 0 : index
    %c0_7 = arith.constant 0 : index
    %c0_8 = arith.constant 0 : index
    %9 = vector.load %arg5[%c0_6, %c0_7, %c0_8] : memref<1x8x8xf32, #tpu.memory_space<vmem>>, vector<1x8x8xf32>
    %10 = vector.shape_cast %9 : vector<1x8x8xf32> to vector<8x8xf32>
    %cst_9 = arith.constant 0.000000e+00 : f32
    %11 = vector.broadcast %cst_9 : f32 to vector<8x8xf32>
    %12 = arith.cmpf oeq, %10, %11 : vector<8x8xf32>
    %cst_10 = arith.constant -1.000000e+30 : f32
    %13 = vector.broadcast %cst_10 : f32 to vector<8x8xf32>
    %14 = arith.select %12, %13, %8 : vector<8x8xi1>, vector<8x8xf32>
    %cst_11 = arith.constant dense<0xFF800000> : vector<8xf32>
    %15 = vector.multi_reduction <maximumf>, %14, %cst_11 [1] : vector<8x8xf32> to vector<8xf32>
    %16 = vector.shape_cast %15 : vector<8xf32> to vector<8x1xf32>
    %17 = vector.broadcast %16 : vector<8x1xf32> to vector<8x8xf32>
    %18 = arith.subf %14, %17 : vector<8x8xf32>
    %19 = math.exp %18 : vector<8x8xf32>
    %cst_12 = arith.constant dense<0.000000e+00> : vector<8xf32>
    %20 = vector.multi_reduction <add>, %19, %cst_12 [1] : vector<8x8xf32> to vector<8xf32>
    %21 = vector.shape_cast %20 : vector<8xf32> to vector<8x1xf32>
    %22 = tpu.reciprocal %21 {approx = true} : vector<8x1xf32> -> vector<8x1xf32>
    %23 = vector.broadcast %22 : vector<8x1xf32> to vector<8x8xf32>
    %24 = arith.mulf %19, %23 : vector<8x8xf32>
    %25 = arith.truncf %24 : vector<8x8xf32> to vector<8x8xbf16>
    %c0_13 = arith.constant 0 : index
    %c0_14 = arith.constant 0 : index
    %c0_15 = arith.constant 0 : index
    %26 = vector.load %arg4[%c0_13, %c0_14, %c0_15] : memref<1x8x8xf32, #tpu.memory_space<vmem>>, vector<1x8x8xf32>
    %27 = vector.shape_cast %26 : vector<1x8x8xf32> to vector<8x8xf32>
    %28 = arith.truncf %27 : vector<8x8xf32> to vector<8x8xbf16>
    %cst_16 = arith.constant dense<0.000000e+00> : vector<8x8xf32>
    %29 = tpu.matmul %25, %28, %cst_16 {dimension_numbers = #tpu.dot_dimension_numbers<[1], [0], [0], [1], [0, 0, 1, 1], [], []>} : vector<8x8xbf16>, vector<8x8xbf16>, vector<8x8xf32> -> vector<8x8xf32>
    %c0_17 = arith.constant 0 : index
    %c0_18 = arith.constant 0 : index
    %c0_19 = arith.constant 0 : index
    %30 = vector.load %arg6[%c0_17, %c0_18, %c0_19] : memref<1x8x8xf32, #tpu.memory_space<vmem>>, vector<1x8x8xf32>
    %31 = vector.shape_cast %30 : vector<1x8x8xf32> to vector<8x8xf32>
    %32 = vector.shape_cast %29 : vector<8x8xf32> to vector<1x8x8xf32>
    tpu.vector_store %arg6[%c0_17, %c0_18, %c0_19], %32 {strides = array<i32>} : memref<1x8x8xf32, #tpu.memory_space<vmem>>, vector<1x8x8xf32>,
    return
  }
  func.func @transform_0(%arg0: i32, %arg1: i32) -> (i32, i32, i32) {
    %c4_i32 = arith.constant 4 : i32
    %0 = arith.muli %arg0, %c4_i32 : i32
    %1 = arith.addi %0, %arg1 : i32
    %c0_i32 = arith.constant 0 : i32
    %c0_i32_0 = arith.constant 0 : i32
    %c0_i32_1 = arith.constant 0 : i32
    return %1, %c0_i32, %c0_i32_0 : i32, i32, i32
  }
  func.func @transform_1(%arg0: i32, %arg1: i32) -> (i32, i32, i32) {
    %c4_i32 = arith.constant 4 : i32
    %0 = arith.muli %arg0, %c4_i32 : i32
    %1 = arith.addi %0, %arg1 : i32
    %c0_i32 = arith.constant 0 : i32
    %c0_i32_0 = arith.constant 0 : i32
    %c0_i32_1 = arith.constant 0 : i32
    return %1, %c0_i32, %c0_i32_0 : i32, i32, i32
  }
  func.func @transform_2(%arg0: i32, %arg1: i32) -> (i32, i32, i32) {
    %c4_i32 = arith.constant 4 : i32
    %0 = arith.muli %arg0, %c4_i32 : i32
    %1 = arith.addi %0, %arg1 : i32
    %c0_i32 = arith.constant 0 : i32
    %c0_i32_0 = arith.constant 0 : i32
    %c0_i32_1 = arith.constant 0 : i32
    return %1, %c0_i32, %c0_i32_0 : i32, i32, i32
  }
  func.func @transform_3(%arg0: i32, %arg1: i32) -> (i32, i32, i32) {
    %c0_i32 = arith.constant 0 : i32
    %c0_i32_0 = arith.constant 0 : i32
    %c0_i32_1 = arith.constant 0 : i32
    return %arg0, %c0_i32, %c0_i32_0 : i32, i32, i32
  }
  func.func @transform_4(%arg0: i32, %arg1: i32) -> (i32, i32, i32) {
    %c4_i32 = arith.constant 4 : i32
    %0 = arith.muli %arg0, %c4_i32 : i32
    %1 = arith.addi %0, %arg1 : i32
    %c0_i32 = arith.constant 0 : i32
    %c0_i32_0 = arith.constant 0 : i32
    %c0_i32_1 = arith.constant 0 : i32
    return %1, %c0_i32, %c0_i32_0 : i32, i32, i32
  }
}

module attributes {stable_mosaic.version = 11 : i64} {
  func.func @_proj_add_ln_kernel(%arg0: i32, %arg1: memref<16x32xf32, #tpu.memory_space<vmem>>, %arg2: memref<16x32xf32, #tpu.memory_space<vmem>>, %arg3: memref<32x32xf32, #tpu.memory_space<vmem>>, %arg4: memref<1x32xf32, #tpu.memory_space<vmem>>, %arg5: memref<1x32xf32, #tpu.memory_space<vmem>>, %arg6: memref<1x32xf32, #tpu.memory_space<vmem>>, %arg7: memref<16x32xf32, #tpu.memory_space<vmem>>) attributes {dimension_semantics = [#tpu.dimension_semantics<parallel>], iteration_bounds = array<i64: 1>, scalar_prefetch = 0 : i64, scratch_operands = 0 : i64, tpu.core_type = #tpu.core_type<tc>, window_params = [{transform_indices = @transform_0, window_bounds = array<i64: 16, 32>}, {transform_indices = @transform_1, window_bounds = array<i64: 16, 32>}, {pipeline_mode = #tpu.pipeline_mode<synchronous>, transform_indices = @transform_2, window_bounds = array<i64: 32, 32>}, {pipeline_mode = #tpu.pipeline_mode<synchronous>, transform_indices = @transform_3, window_bounds = array<i64: 1, 32>}, {pipeline_mode = #tpu.pipeline_mode<synchronous>, transform_indices = @transform_4, window_bounds = array<i64: 1, 32>}, {pipeline_mode = #tpu.pipeline_mode<synchronous>, transform_indices = @transform_5, window_bounds = array<i64: 1, 32>}, {transform_indices = @transform_6, window_bounds = array<i64: 16, 32>}]} {
    %c0 = arith.constant 0 : index
    %c0_0 = arith.constant 0 : index
    %0 = vector.load %arg2[%c0, %c0_0] : memref<16x32xf32, #tpu.memory_space<vmem>>, vector<16x32xf32>
    %1 = arith.truncf %0 : vector<16x32xf32> to vector<16x32xbf16>
    %c0_1 = arith.constant 0 : index
    %c0_2 = arith.constant 0 : index
    %2 = vector.load %arg3[%c0_1, %c0_2] : memref<32x32xf32, #tpu.memory_space<vmem>>, vector<32x32xf32>
    %3 = arith.truncf %2 : vector<32x32xf32> to vector<32x32xbf16>
    %cst = arith.constant dense<0.000000e+00> : vector<16x32xf32>
    %4 = tpu.matmul %1, %3, %cst {dimension_numbers = #tpu.dot_dimension_numbers<[1], [0], [0], [1], [0, 0, 1, 1], [], []>} : vector<16x32xbf16>, vector<32x32xbf16>, vector<16x32xf32> -> vector<16x32xf32>
    %c0_3 = arith.constant 0 : index
    %c0_4 = arith.constant 0 : index
    %5 = vector.load %arg4[%c0_3, %c0_4] : memref<1x32xf32, #tpu.memory_space<vmem>>, vector<1x32xf32>
    %6 = vector.broadcast %5 : vector<1x32xf32> to vector<16x32xf32>
    %7 = arith.addf %4, %6 : vector<16x32xf32>
    %c0_5 = arith.constant 0 : index
    %c0_6 = arith.constant 0 : index
    %8 = vector.load %arg1[%c0_5, %c0_6] : memref<16x32xf32, #tpu.memory_space<vmem>>, vector<16x32xf32>
    %9 = arith.addf %8, %7 : vector<16x32xf32>
    %c0_7 = arith.constant 0 : index
    %c0_8 = arith.constant 0 : index
    %10 = vector.load %arg5[%c0_7, %c0_8] : memref<1x32xf32, #tpu.memory_space<vmem>>, vector<1x32xf32>
    %c0_9 = arith.constant 0 : index
    %c0_10 = arith.constant 0 : index
    %11 = vector.load %arg6[%c0_9, %c0_10] : memref<1x32xf32, #tpu.memory_space<vmem>>, vector<1x32xf32>
    %cst_11 = arith.constant dense<0.000000e+00> : vector<16xf32>
    %12 = vector.multi_reduction <add>, %9, %cst_11 [1] : vector<16x32xf32> to vector<16xf32>
    %13 = vector.shape_cast %12 : vector<16xf32> to vector<16x1xf32>
    %cst_12 = arith.constant 3.200000e+01 : f32
    %14 = vector.broadcast %cst_12 : f32 to vector<16x1xf32>
    %15 = arith.divf %13, %14 : vector<16x1xf32>
    %16 = vector.broadcast %15 : vector<16x1xf32> to vector<16x32xf32>
    %17 = arith.subf %9, %16 : vector<16x32xf32>
    %18 = arith.mulf %17, %17 : vector<16x32xf32>
    %cst_13 = arith.constant dense<0.000000e+00> : vector<16xf32>
    %19 = vector.multi_reduction <add>, %18, %cst_13 [1] : vector<16x32xf32> to vector<16xf32>
    %20 = vector.shape_cast %19 : vector<16xf32> to vector<16x1xf32>
    %cst_14 = arith.constant 3.200000e+01 : f32
    %21 = vector.broadcast %cst_14 : f32 to vector<16x1xf32>
    %22 = arith.divf %20, %21 : vector<16x1xf32>
    %23 = vector.broadcast %15 : vector<16x1xf32> to vector<16x32xf32>
    %24 = arith.subf %9, %23 : vector<16x32xf32>
    %cst_15 = arith.constant 9.99999974E-6 : f32
    %25 = vector.broadcast %cst_15 : f32 to vector<16x1xf32>
    %26 = arith.addf %22, %25 : vector<16x1xf32>
    %27 = math.rsqrt %26 : vector<16x1xf32>
    %28 = vector.broadcast %27 : vector<16x1xf32> to vector<16x32xf32>
    %29 = arith.mulf %24, %28 : vector<16x32xf32>
    %30 = vector.broadcast %10 : vector<1x32xf32> to vector<16x32xf32>
    %31 = arith.mulf %29, %30 : vector<16x32xf32>
    %32 = vector.broadcast %11 : vector<1x32xf32> to vector<16x32xf32>
    %33 = arith.addf %31, %32 : vector<16x32xf32>
    %c0_16 = arith.constant 0 : index
    %c0_17 = arith.constant 0 : index
    %34 = vector.load %arg7[%c0_16, %c0_17] : memref<16x32xf32, #tpu.memory_space<vmem>>, vector<16x32xf32>
    tpu.vector_store %arg7[%c0_16, %c0_17], %33 {strides = array<i32>} : memref<16x32xf32, #tpu.memory_space<vmem>>, vector<16x32xf32>,
    return
  }
  func.func @transform_0(%arg0: i32) -> (i32, i32) {
    %c0_i32 = arith.constant 0 : i32
    %c0_i32_0 = arith.constant 0 : i32
    return %arg0, %c0_i32 : i32, i32
  }
  func.func @transform_1(%arg0: i32) -> (i32, i32) {
    %c0_i32 = arith.constant 0 : i32
    %c0_i32_0 = arith.constant 0 : i32
    return %arg0, %c0_i32 : i32, i32
  }
  func.func @transform_2(%arg0: i32) -> (i32, i32) {
    %c0_i32 = arith.constant 0 : i32
    %c0_i32_0 = arith.constant 0 : i32
    %c0_i32_1 = arith.constant 0 : i32
    return %c0_i32, %c0_i32_0 : i32, i32
  }
  func.func @transform_3(%arg0: i32) -> (i32, i32) {
    %c0_i32 = arith.constant 0 : i32
    %c0_i32_0 = arith.constant 0 : i32
    %c0_i32_1 = arith.constant 0 : i32
    return %c0_i32, %c0_i32_0 : i32, i32
  }
  func.func @transform_4(%arg0: i32) -> (i32, i32) {
    %c0_i32 = arith.constant 0 : i32
    %c0_i32_0 = arith.constant 0 : i32
    %c0_i32_1 = arith.constant 0 : i32
    return %c0_i32, %c0_i32_0 : i32, i32
  }
  func.func @transform_5(%arg0: i32) -> (i32, i32) {
    %c0_i32 = arith.constant 0 : i32
    %c0_i32_0 = arith.constant 0 : i32
    %c0_i32_1 = arith.constant 0 : i32
    return %c0_i32, %c0_i32_0 : i32, i32
  }
  func.func @transform_6(%arg0: i32) -> (i32, i32) {
    %c0_i32 = arith.constant 0 : i32
    %c0_i32_0 = arith.constant 0 : i32
    return %arg0, %c0_i32 : i32, i32
  }
}

module attributes {stable_mosaic.version = 11 : i64} {
  func.func @_ffn_add_ln_kernel(%arg0: i32, %arg1: memref<16x32xf32, #tpu.memory_space<vmem>>, %arg2: memref<32x64xf32, #tpu.memory_space<vmem>>, %arg3: memref<1x64xf32, #tpu.memory_space<vmem>>, %arg4: memref<64x32xf32, #tpu.memory_space<vmem>>, %arg5: memref<1x32xf32, #tpu.memory_space<vmem>>, %arg6: memref<1x32xf32, #tpu.memory_space<vmem>>, %arg7: memref<1x32xf32, #tpu.memory_space<vmem>>, %arg8: memref<16x32xf32, #tpu.memory_space<vmem>>) attributes {dimension_semantics = [#tpu.dimension_semantics<parallel>], iteration_bounds = array<i64: 1>, scalar_prefetch = 0 : i64, scratch_operands = 0 : i64, tpu.core_type = #tpu.core_type<tc>, window_params = [{transform_indices = @transform_0, window_bounds = array<i64: 16, 32>}, {pipeline_mode = #tpu.pipeline_mode<synchronous>, transform_indices = @transform_1, window_bounds = array<i64: 32, 64>}, {pipeline_mode = #tpu.pipeline_mode<synchronous>, transform_indices = @transform_2, window_bounds = array<i64: 1, 64>}, {pipeline_mode = #tpu.pipeline_mode<synchronous>, transform_indices = @transform_3, window_bounds = array<i64: 64, 32>}, {pipeline_mode = #tpu.pipeline_mode<synchronous>, transform_indices = @transform_4, window_bounds = array<i64: 1, 32>}, {pipeline_mode = #tpu.pipeline_mode<synchronous>, transform_indices = @transform_5, window_bounds = array<i64: 1, 32>}, {pipeline_mode = #tpu.pipeline_mode<synchronous>, transform_indices = @transform_6, window_bounds = array<i64: 1, 32>}, {transform_indices = @transform_7, window_bounds = array<i64: 16, 32>}]} {
    %c0 = arith.constant 0 : index
    %c0_0 = arith.constant 0 : index
    %0 = vector.load %arg1[%c0, %c0_0] : memref<16x32xf32, #tpu.memory_space<vmem>>, vector<16x32xf32>
    %1 = arith.truncf %0 : vector<16x32xf32> to vector<16x32xbf16>
    %c0_1 = arith.constant 0 : index
    %c0_2 = arith.constant 0 : index
    %2 = vector.load %arg2[%c0_1, %c0_2] : memref<32x64xf32, #tpu.memory_space<vmem>>, vector<32x64xf32>
    %3 = arith.truncf %2 : vector<32x64xf32> to vector<32x64xbf16>
    %cst = arith.constant dense<0.000000e+00> : vector<16x64xf32>
    %4 = tpu.matmul %1, %3, %cst {dimension_numbers = #tpu.dot_dimension_numbers<[1], [0], [0], [1], [0, 0, 1, 1], [], []>} : vector<16x32xbf16>, vector<32x64xbf16>, vector<16x64xf32> -> vector<16x64xf32>
    %c0_3 = arith.constant 0 : index
    %c0_4 = arith.constant 0 : index
    %5 = vector.load %arg3[%c0_3, %c0_4] : memref<1x64xf32, #tpu.memory_space<vmem>>, vector<1x64xf32>
    %6 = vector.broadcast %5 : vector<1x64xf32> to vector<16x64xf32>
    %7 = arith.addf %4, %6 : vector<16x64xf32>
    %cst_5 = arith.constant 0.000000e+00 : f32
    %8 = vector.broadcast %cst_5 : f32 to vector<16x64xf32>
    %9 = arith.maximumf %7, %8 : vector<16x64xf32>
    %10 = arith.truncf %9 : vector<16x64xf32> to vector<16x64xbf16>
    %c0_6 = arith.constant 0 : index
    %c0_7 = arith.constant 0 : index
    %11 = vector.load %arg4[%c0_6, %c0_7] : memref<64x32xf32, #tpu.memory_space<vmem>>, vector<64x32xf32>
    %12 = arith.truncf %11 : vector<64x32xf32> to vector<64x32xbf16>
    %cst_8 = arith.constant dense<0.000000e+00> : vector<16x32xf32>
    %13 = tpu.matmul %10, %12, %cst_8 {dimension_numbers = #tpu.dot_dimension_numbers<[1], [0], [0], [1], [0, 0, 1, 1], [], []>} : vector<16x64xbf16>, vector<64x32xbf16>, vector<16x32xf32> -> vector<16x32xf32>
    %c0_9 = arith.constant 0 : index
    %c0_10 = arith.constant 0 : index
    %14 = vector.load %arg5[%c0_9, %c0_10] : memref<1x32xf32, #tpu.memory_space<vmem>>, vector<1x32xf32>
    %15 = vector.broadcast %14 : vector<1x32xf32> to vector<16x32xf32>
    %16 = arith.addf %13, %15 : vector<16x32xf32>
    %17 = arith.addf %0, %16 : vector<16x32xf32>
    %c0_11 = arith.constant 0 : index
    %c0_12 = arith.constant 0 : index
    %18 = vector.load %arg6[%c0_11, %c0_12] : memref<1x32xf32, #tpu.memory_space<vmem>>, vector<1x32xf32>
    %c0_13 = arith.constant 0 : index
    %c0_14 = arith.constant 0 : index
    %19 = vector.load %arg7[%c0_13, %c0_14] : memref<1x32xf32, #tpu.memory_space<vmem>>, vector<1x32xf32>
    %cst_15 = arith.constant dense<0.000000e+00> : vector<16xf32>
    %20 = vector.multi_reduction <add>, %17, %cst_15 [1] : vector<16x32xf32> to vector<16xf32>
    %21 = vector.shape_cast %20 : vector<16xf32> to vector<16x1xf32>
    %cst_16 = arith.constant 3.200000e+01 : f32
    %22 = vector.broadcast %cst_16 : f32 to vector<16x1xf32>
    %23 = arith.divf %21, %22 : vector<16x1xf32>
    %24 = vector.broadcast %23 : vector<16x1xf32> to vector<16x32xf32>
    %25 = arith.subf %17, %24 : vector<16x32xf32>
    %26 = arith.mulf %25, %25 : vector<16x32xf32>
    %cst_17 = arith.constant dense<0.000000e+00> : vector<16xf32>
    %27 = vector.multi_reduction <add>, %26, %cst_17 [1] : vector<16x32xf32> to vector<16xf32>
    %28 = vector.shape_cast %27 : vector<16xf32> to vector<16x1xf32>
    %cst_18 = arith.constant 3.200000e+01 : f32
    %29 = vector.broadcast %cst_18 : f32 to vector<16x1xf32>
    %30 = arith.divf %28, %29 : vector<16x1xf32>
    %31 = vector.broadcast %23 : vector<16x1xf32> to vector<16x32xf32>
    %32 = arith.subf %17, %31 : vector<16x32xf32>
    %cst_19 = arith.constant 9.99999974E-6 : f32
    %33 = vector.broadcast %cst_19 : f32 to vector<16x1xf32>
    %34 = arith.addf %30, %33 : vector<16x1xf32>
    %35 = math.rsqrt %34 : vector<16x1xf32>
    %36 = vector.broadcast %35 : vector<16x1xf32> to vector<16x32xf32>
    %37 = arith.mulf %32, %36 : vector<16x32xf32>
    %38 = vector.broadcast %18 : vector<1x32xf32> to vector<16x32xf32>
    %39 = arith.mulf %37, %38 : vector<16x32xf32>
    %40 = vector.broadcast %19 : vector<1x32xf32> to vector<16x32xf32>
    %41 = arith.addf %39, %40 : vector<16x32xf32>
    %c0_20 = arith.constant 0 : index
    %c0_21 = arith.constant 0 : index
    %42 = vector.load %arg8[%c0_20, %c0_21] : memref<16x32xf32, #tpu.memory_space<vmem>>, vector<16x32xf32>
    tpu.vector_store %arg8[%c0_20, %c0_21], %41 {strides = array<i32>} : memref<16x32xf32, #tpu.memory_space<vmem>>, vector<16x32xf32>,
    return
  }
  func.func @transform_0(%arg0: i32) -> (i32, i32) {
    %c0_i32 = arith.constant 0 : i32
    %c0_i32_0 = arith.constant 0 : i32
    return %arg0, %c0_i32 : i32, i32
  }
  func.func @transform_1(%arg0: i32) -> (i32, i32) {
    %c0_i32 = arith.constant 0 : i32
    %c0_i32_0 = arith.constant 0 : i32
    %c0_i32_1 = arith.constant 0 : i32
    return %c0_i32, %c0_i32_0 : i32, i32
  }
  func.func @transform_2(%arg0: i32) -> (i32, i32) {
    %c0_i32 = arith.constant 0 : i32
    %c0_i32_0 = arith.constant 0 : i32
    %c0_i32_1 = arith.constant 0 : i32
    return %c0_i32, %c0_i32_0 : i32, i32
  }
  func.func @transform_3(%arg0: i32) -> (i32, i32) {
    %c0_i32 = arith.constant 0 : i32
    %c0_i32_0 = arith.constant 0 : i32
    %c0_i32_1 = arith.constant 0 : i32
    return %c0_i32, %c0_i32_0 : i32, i32
  }
  func.func @transform_4(%arg0: i32) -> (i32, i32) {
    %c0_i32 = arith.constant 0 : i32
    %c0_i32_0 = arith.constant 0 : i32
    %c0_i32_1 = arith.constant 0 : i32
    return %c0_i32, %c0_i32_0 : i32, i32
  }
  func.func @transform_5(%arg0: i32) -> (i32, i32) {
    %c0_i32 = arith.constant 0 : i32
    %c0_i32_0 = arith.constant 0 : i32
    %c0_i32_1 = arith.constant 0 : i32
    return %c0_i32, %c0_i32_0 : i32, i32
  }
  func.func @transform_6(%arg0: i32) -> (i32, i32) {
    %c0_i32 = arith.constant 0 : i32
    %c0_i32_0 = arith.constant 0 : i32
    %c0_i32_1 = arith.constant 0 : i32
    return %c0_i32, %c0_i32_0 : i32, i32
  }
  func.func @transform_7(%arg0: i32) -> (i32, i32) {
    %c0_i32 = arith.constant 0 : i32
    %c0_i32_0 = arith.constant 0 : i32
    return %arg0, %c0_i32 : i32, i32
  }
}

module attributes {stable_mosaic.version = 11 : i64} {
  func.func @_gen_kernel(%arg0: i32, %arg1: memref<16x32xf32, #tpu.memory_space<vmem>>, %arg2: memref<32x50xf32, #tpu.memory_space<vmem>>, %arg3: memref<1x50xf32, #tpu.memory_space<vmem>>, %arg4: memref<16x50xf32, #tpu.memory_space<vmem>>) attributes {dimension_semantics = [#tpu.dimension_semantics<parallel>], iteration_bounds = array<i64: 1>, scalar_prefetch = 0 : i64, scratch_operands = 0 : i64, tpu.core_type = #tpu.core_type<tc>, window_params = [{transform_indices = @transform_0, window_bounds = array<i64: 16, 32>}, {pipeline_mode = #tpu.pipeline_mode<synchronous>, transform_indices = @transform_1, window_bounds = array<i64: 32, 50>}, {pipeline_mode = #tpu.pipeline_mode<synchronous>, transform_indices = @transform_2, window_bounds = array<i64: 1, 50>}, {transform_indices = @transform_3, window_bounds = array<i64: 16, 50>}]} {
    %c0 = arith.constant 0 : index
    %c0_0 = arith.constant 0 : index
    %0 = vector.load %arg1[%c0, %c0_0] : memref<16x32xf32, #tpu.memory_space<vmem>>, vector<16x32xf32>
    %1 = arith.truncf %0 : vector<16x32xf32> to vector<16x32xbf16>
    %c0_1 = arith.constant 0 : index
    %c0_2 = arith.constant 0 : index
    %2 = vector.load %arg2[%c0_1, %c0_2] : memref<32x50xf32, #tpu.memory_space<vmem>>, vector<32x50xf32>
    %3 = arith.truncf %2 : vector<32x50xf32> to vector<32x50xbf16>
    %cst = arith.constant dense<0.000000e+00> : vector<16x50xf32>
    %4 = tpu.matmul %1, %3, %cst {dimension_numbers = #tpu.dot_dimension_numbers<[1], [0], [0], [1], [0, 0, 1, 1], [], []>} : vector<16x32xbf16>, vector<32x50xbf16>, vector<16x50xf32> -> vector<16x50xf32>
    %c0_3 = arith.constant 0 : index
    %c0_4 = arith.constant 0 : index
    %5 = vector.load %arg3[%c0_3, %c0_4] : memref<1x50xf32, #tpu.memory_space<vmem>>, vector<1x50xf32>
    %6 = vector.broadcast %5 : vector<1x50xf32> to vector<16x50xf32>
    %7 = arith.addf %4, %6 : vector<16x50xf32>
    %cst_5 = arith.constant dense<0xFF800000> : vector<16xf32>
    %8 = vector.multi_reduction <maximumf>, %7, %cst_5 [1] : vector<16x50xf32> to vector<16xf32>
    %9 = vector.shape_cast %8 : vector<16xf32> to vector<16x1xf32>
    %10 = vector.broadcast %9 : vector<16x1xf32> to vector<16x50xf32>
    %11 = arith.subf %7, %10 : vector<16x50xf32>
    %12 = math.exp %11 : vector<16x50xf32>
    %cst_6 = arith.constant dense<0.000000e+00> : vector<16xf32>
    %13 = vector.multi_reduction <add>, %12, %cst_6 [1] : vector<16x50xf32> to vector<16xf32>
    %14 = vector.shape_cast %13 : vector<16xf32> to vector<16x1xf32>
    %15 = vector.broadcast %14 : vector<16x1xf32> to vector<16x50xf32>
    %16 = arith.divf %12, %15 : vector<16x50xf32>
    %c0_7 = arith.constant 0 : index
    %c0_8 = arith.constant 0 : index
    %17 = vector.load %arg4[%c0_7, %c0_8] : memref<16x50xf32, #tpu.memory_space<vmem>>, vector<16x50xf32>
    tpu.vector_store %arg4[%c0_7, %c0_8], %16 {strides = array<i32>} : memref<16x50xf32, #tpu.memory_space<vmem>>, vector<16x50xf32>,
    return
  }
  func.func @transform_0(%arg0: i32) -> (i32, i32) {
    %c0_i32 = arith.constant 0 : i32
    %c0_i32_0 = arith.constant 0 : i32
    return %arg0, %c0_i32 : i32, i32
  }
  func.func @transform_1(%arg0: i32) -> (i32, i32) {
    %c0_i32 = arith.constant 0 : i32
    %c0_i32_0 = arith.constant 0 : i32
    %c0_i32_1 = arith.constant 0 : i32
    return %c0_i32, %c0_i32_0 : i32, i32
  }
  func.func @transform_2(%arg0: i32) -> (i32, i32) {
    %c0_i32 = arith.constant 0 : i32
    %c0_i32_0 = arith.constant 0 : i32
    %c0_i32_1 = arith.constant 0 : i32
    return %c0_i32, %c0_i32_0 : i32, i32
  }
  func.func @transform_3(%arg0: i32) -> (i32, i32) {
    %c0_i32 = arith.constant 0 : i32
    %c0_i32_0 = arith.constant 0 : i32
    return %arg0, %c0_i32 : i32, i32
  }
}

module attributes {stable_mosaic.version = 11 : i64} {
  func.func @_linear_kernel(%arg0: i32, %arg1: memref<32x32xf32, #tpu.memory_space<vmem>>, %arg2: memref<32x32xf32, #tpu.memory_space<vmem>>, %arg3: memref<1x32xf32, #tpu.memory_space<vmem>>, %arg4: memref<32x32xf32, #tpu.memory_space<vmem>>) attributes {dimension_semantics = [#tpu.dimension_semantics<parallel>], iteration_bounds = array<i64: 1>, scalar_prefetch = 0 : i64, scratch_operands = 0 : i64, tpu.core_type = #tpu.core_type<tc>, window_params = [{transform_indices = @transform_0, window_bounds = array<i64: 32, 32>}, {pipeline_mode = #tpu.pipeline_mode<synchronous>, transform_indices = @transform_1, window_bounds = array<i64: 32, 32>}, {pipeline_mode = #tpu.pipeline_mode<synchronous>, transform_indices = @transform_2, window_bounds = array<i64: 1, 32>}, {transform_indices = @transform_3, window_bounds = array<i64: 32, 32>}]} {
    %c0 = arith.constant 0 : index
    %c0_0 = arith.constant 0 : index
    %0 = vector.load %arg1[%c0, %c0_0] : memref<32x32xf32, #tpu.memory_space<vmem>>, vector<32x32xf32>
    %1 = arith.truncf %0 : vector<32x32xf32> to vector<32x32xbf16>
    %c0_1 = arith.constant 0 : index
    %c0_2 = arith.constant 0 : index
    %2 = vector.load %arg2[%c0_1, %c0_2] : memref<32x32xf32, #tpu.memory_space<vmem>>, vector<32x32xf32>
    %3 = arith.truncf %2 : vector<32x32xf32> to vector<32x32xbf16>
    %cst = arith.constant dense<0.000000e+00> : vector<32x32xf32>
    %4 = tpu.matmul %1, %3, %cst {dimension_numbers = #tpu.dot_dimension_numbers<[1], [0], [0], [1], [0, 0, 1, 1], [], []>} : vector<32x32xbf16>, vector<32x32xbf16>, vector<32x32xf32> -> vector<32x32xf32>
    %c0_3 = arith.constant 0 : index
    %c0_4 = arith.constant 0 : index
    %5 = vector.load %arg3[%c0_3, %c0_4] : memref<1x32xf32, #tpu.memory_space<vmem>>, vector<1x32xf32>
    %6 = vector.broadcast %5 : vector<1x32xf32> to vector<32x32xf32>
    %7 = arith.addf %4, %6 : vector<32x32xf32>
    %c0_5 = arith.constant 0 : index
    %c0_6 = arith.constant 0 : index
    %8 = vector.load %arg4[%c0_5, %c0_6] : memref<32x32xf32, #tpu.memory_space<vmem>>, vector<32x32xf32>
    tpu.vector_store %arg4[%c0_5, %c0_6], %7 {strides = array<i32>} : memref<32x32xf32, #tpu.memory_space<vmem>>, vector<32x32xf32>,
    return
  }
  func.func @transform_0(%arg0: i32) -> (i32, i32) {
    %c0_i32 = arith.constant 0 : i32
    %c0_i32_0 = arith.constant 0 : i32
    return %arg0, %c0_i32 : i32, i32
  }
  func.func @transform_1(%arg0: i32) -> (i32, i32) {
    %c0_i32 = arith.constant 0 : i32
    %c0_i32_0 = arith.constant 0 : i32
    %c0_i32_1 = arith.constant 0 : i32
    return %c0_i32, %c0_i32_0 : i32, i32
  }
  func.func @transform_2(%arg0: i32) -> (i32, i32) {
    %c0_i32 = arith.constant 0 : i32
    %c0_i32_0 = arith.constant 0 : i32
    %c0_i32_1 = arith.constant 0 : i32
    return %c0_i32, %c0_i32_0 : i32, i32
  }
  func.func @transform_3(%arg0: i32) -> (i32, i32) {
    %c0_i32 = arith.constant 0 : i32
    %c0_i32_0 = arith.constant 0 : i32
    return %arg0, %c0_i32 : i32, i32
  }
}

</mosaic_0001>

<llo_original>
// kernel: encdec_forward.24
$region0: #{encdec_forward.24}
  #allocation0 [shape = 'u32[]', space=smem, size = 0x4, offset = 0x4, fixed_abs, tag = 'smem constant byte address 0x4 - core index']
  #allocation1 [shape = 'u32[72,128]{1,0:T(1,128)}', space=vmem, size = 0x9000, scoped, tag = 'internal scratch']
  %s0 = inlined_call_operand.vmem [shape: f32[8,8,8], index: 0, kind: input, shape index: {}, may-alias: {0,1,2}]
  %s1 = inlined_call_operand.vmem [shape: f32[8,8,8], index: 1, kind: input, shape index: {}, may-alias: {0,1,2}]
  %s2 = inlined_call_operand.vmem [shape: f32[8,8,8], index: 2, kind: input, shape index: {}, may-alias: {0,1,2}]
  %s3 = inlined_call_operand.vmem [shape: f32[2,8,8], index: 3, kind: input, shape index: {}]
  %s4 = inlined_call_operand.vmem [shape: f32[8,8,8], index: 4, kind: output, shape index: {}]
  %s5 = sld [smem:[#allocation0]]
  $region49: #{encdec_forward.24} parent=0
    _
  %s7 = ssub.s32 1, %s5
  %s8 = scalar_select 0, %s7, %s5
  loop: start=0, step=1, limit=10
  $region2: #{encdec_forward.24} parent=0 // loop_pre_header
    _
  $region3: #{encdec_forward.24} parent=0 // loop_header
    %s10 = sphi 0, %s14
    %p11 = scmp.ge.s32.totalorder %s10, 10
    %s17 = sphi 0, %s29
    %s18 = sphi 0, %s25
    %s19 = sphi 0, %s17
    %s20 = sphi 0, %s18
    %s21 = sphi 0, %s19
    %s22 = sphi 0, %s20
    %s36 = sphi 0, %s38
    %s39 = sphi 0, %s36
    %s40 = sphi 0, %s39
    %s56 = sphi 0, %s40
    %s66 = sphi 0, %s68
    %s69 = sphi 0, %s66
    %s70 = sphi 0, %s69
    %s86 = sphi 0, %s70
    %s96 = sphi 0, %s98
    %s99 = sphi 0, %s96
    %s100 = sphi 0, %s99
    %s116 = sphi 0, %s100
    %s122 = sphi 0, %s124
    %s125 = sphi 0, %s122
    %s126 = sphi 0, %s125
    %s142 = sphi 0, %s126
    %s152 = sphi 0, %s154
    %s155 = sphi 0, %s152
    %s156 = sphi 0, %s155
    %s172 = sphi 0, %s156
  $region4: #{encdec_forward.24} parent=0 // loop_header_branch
    %13 = sbr.rel (%p11) target = $region8
  $region5: #{encdec_forward.24} parent=0 // loop_body
    %s15 = ssub.s32 %s10, 1
    %s16 = ssub.s32 %s10, 2
    %s23 = sadd.s32 1, %s18
    %p24 = scmp.ge.s32.totalorder %s23, 4
    %s25 = scalar_select %p24, 0, %s23
    %s26 = sadd.s32 1, %s17
    %s27 = scalar_select %p24, %s26, %s17
    %p28 = scmp.ge.s32.totalorder %s27, 2
    %s29 = scalar_select %p28, 0, %s27
    %s30 = smul.u32 %s17, 4
    %s31 = sadd.s32 %s30, %s18
    %s32 = smul.u32 %s29, 4
    %s33 = sadd.s32 %s32, %s25
    %s34 = ssub.s32 %s31, %s33
    %p35 = scmp.eq.s32.totalorder %s34, 0
    %s37 = sadd.s32 %s36, 1
    %s38 = scalar_select %p35, %s36, %s37
    %p41 = pneg %p35
    %p42 = scmp.eq.s32.totalorder %s10, 7
    %p43 = por %p41, %p42
    %p44 = scmp.ne.s32.totalorder %s36, %s39
    %p45 = scmp.eq.s32.totalorder %s10, 0
    %p46 = por %p44, %p45
    %p47 = scmp.ne.s32.totalorder %s36, %s39
    %p48 = scmp.eq.s32.totalorder %s15, 7
    %p49 = por %p47, %p48
    %p50 = scmp.ne.s32.totalorder %s39, %s40
    %p51 = scmp.eq.s32.totalorder %s15, 0
    %p52 = por %p50, %p51
    %p53 = scmp.ne.s32.totalorder %s39, %s40
    %p54 = scmp.eq.s32.totalorder %s16, 7
    %p55 = por %p53, %p54
    %p57 = scmp.ne.s32.totalorder %s40, %s56
    %p58 = scmp.eq.s32.totalorder %s16, 0
    %p59 = por %p57, %p58
    %s60 = smul.u32 %s17, 4
    %s61 = sadd.s32 %s60, %s18
    %s62 = smul.u32 %s29, 4
    %s63 = sadd.s32 %s62, %s25
    %s64 = ssub.s32 %s61, %s63
    %p65 = scmp.eq.s32.totalorder %s64, 0
    %s67 = sadd.s32 %s66, 1
    %s68 = scalar_select %p65, %s66, %s67
    %p71 = pneg %p65
    %p72 = scmp.eq.s32.totalorder %s10, 7
    %p73 = por %p71, %p72
    %p74 = scmp.ne.s32.totalorder %s66, %s69
    %p75 = scmp.eq.s32.totalorder %s10, 0
    %p76 = por %p74, %p75
    %p77 = scmp.ne.s32.totalorder %s66, %s69
    %p78 = scmp.eq.s32.totalorder %s15, 7
    %p79 = por %p77, %p78
    %p80 = scmp.ne.s32.totalorder %s69, %s70
    %p81 = scmp.eq.s32.totalorder %s15, 0
    %p82 = por %p80, %p81
    %p83 = scmp.ne.s32.totalorder %s69, %s70
    %p84 = scmp.eq.s32.totalorder %s16, 7
    %p85 = por %p83, %p84
    %p87 = scmp.ne.s32.totalorder %s70, %s86
    %p88 = scmp.eq.s32.totalorder %s16, 0
    %p89 = por %p87, %p88
    %s90 = smul.u32 %s17, 4
    %s91 = sadd.s32 %s90, %s18
    %s92 = smul.u32 %s29, 4
    %s93 = sadd.s32 %s92, %s25
    %s94 = ssub.s32 %s91, %s93
    %p95 = scmp.eq.s32.totalorder %s94, 0
    %s97 = sadd.s32 %s96, 1
    %s98 = scalar_select %p95, %s96, %s97
    %p101 = pneg %p95
    %p102 = scmp.eq.s32.totalorder %s10, 7
    %p103 = por %p101, %p102
    %p104 = scmp.ne.s32.totalorder %s96, %s99
    %p105 = scmp.eq.s32.totalorder %s10, 0
    %p106 = por %p104, %p105
    %p107 = scmp.ne.s32.totalorder %s96, %s99
    %p108 = scmp.eq.s32.totalorder %s15, 7
    %p109 = por %p107, %p108
    %p110 = scmp.ne.s32.totalorder %s99, %s100
    %p111 = scmp.eq.s32.totalorder %s15, 0
    %p112 = por %p110, %p111
    %p113 = scmp.ne.s32.totalorder %s99, %s100
    %p114 = scmp.eq.s32.totalorder %s16, 7
    %p115 = por %p113, %p114
    %p117 = scmp.ne.s32.totalorder %s100, %s116
    %p118 = scmp.eq.s32.totalorder %s16, 0
    %p119 = por %p117, %p118
    %s120 = ssub.s32 %s17, %s29
    %p121 = scmp.eq.s32.totalorder %s120, 0
    %s123 = sadd.s32 %s122, 1
    %s124 = scalar_select %p121, %s122, %s123
    %p127 = pneg %p121
    %p128 = scmp.eq.s32.totalorder %s10, 7
    %p129 = por %p127, %p128
    %p130 = scmp.ne.s32.totalorder %s122, %s125
    %p131 = scmp.eq.s32.totalorder %s10, 0
    %p132 = por %p130, %p131
    %p133 = scmp.ne.s32.totalorder %s122, %s125
    %p134 = scmp.eq.s32.totalorder %s15, 7
    %p135 = por %p133, %p134
    %p136 = scmp.ne.s32.totalorder %s125, %s126
    %p137 = scmp.eq.s32.totalorder %s15, 0
    %p138 = por %p136, %p137
    %p139 = scmp.ne.s32.totalorder %s125, %s126
    %p140 = scmp.eq.s32.totalorder %s16, 7
    %p141 = por %p139, %p140
    %p143 = scmp.ne.s32.totalorder %s126, %s142
    %p144 = scmp.eq.s32.totalorder %s16, 0
    %p145 = por %p143, %p144
    %s146 = smul.u32 %s17, 4
    %s147 = sadd.s32 %s146, %s18
    %s148 = smul.u32 %s29, 4
    %s149 = sadd.s32 %s148, %s25
    %s150 = ssub.s32 %s147, %s149
    %p151 = scmp.eq.s32.totalorder %s150, 0
    %s153 = sadd.s32 %s152, 1
    %s154 = scalar_select %p151, %s152, %s153
    %p157 = pneg %p151
    %p158 = scmp.eq.s32.totalorder %s10, 7
    %p159 = por %p157, %p158
    %p160 = scmp.ne.s32.totalorder %s152, %s155
    %p161 = scmp.eq.s32.totalorder %s10, 0
    %p162 = por %p160, %p161
    %p163 = scmp.ne.s32.totalorder %s152, %s155
    %p164 = scmp.eq.s32.totalorder %s15, 7
    %p165 = por %p163, %p164
    %p166 = scmp.ne.s32.totalorder %s155, %s156
    %p167 = scmp.eq.s32.totalorder %s15, 0
    %p168 = por %p166, %p167
    %p169 = scmp.ne.s32.totalorder %s155, %s156
    %p170 = scmp.eq.s32.totalorder %s16, 7
    %p171 = por %p169, %p170
    %p173 = scmp.ne.s32.totalorder %s156, %s172
    %p174 = scmp.eq.s32.totalorder %s16, 0
    %p175 = por %p173, %p174
    %p176 = scmp.le.s32.totalorder 1, %s10
    %p177 = scmp.lt.s32.totalorder %s10, 9
    %p178 = pnand %p176, %p177
    %p179 = pneg %p178
    // Predicated region
    $region9: #{encdec_forward.24} parent=5 // pred_check
      _
    $region10: #{encdec_forward.24} parent=5 // pred_check_branch
      %181 = sbr.rel (%p178) target = $region12
    $region11: #{encdec_forward.24} parent=5 // pred_region
      %s182 = ssub.s32 %s10, 1
    $region12: #{encdec_forward.24} parent=5 // pred_fallthru
      _
    %p183 = scmp.lt.s32.totalorder %s10, 8
    // Predicated region
    $region13: #{encdec_forward.24} parent=5 // pred_check
      %p184 = pneg %p183
    $region14: #{encdec_forward.24} parent=5 // pred_check_branch
      %186 = sbr.rel (%p184) target = $region16
    $region15: #{encdec_forward.24} parent=5 // pred_region
      // Predicated region
      $region17: #{encdec_forward.24} parent=15 // pred_check
        %p187 = pneg %p46
      $region18: #{encdec_forward.24} parent=15 // pred_check_branch
        %189 = sbr.rel (%p187) target = $region20
      $region19: #{encdec_forward.24} parent=15 // pred_region
        %s190 = smul.u32 %s17, 4
        %s191 = sadd.s32 %s190, %s18
        %p192 = scmp.lt.s32.totalorder %s191, 7
        %s193 = scalar_select %p192, %s191, 7
        %s194 = smul.addr %s193, 8
        %s195 = scalar_lea.vmem %s0, %s194
        %s196 = smul.u32 %s17, 4
        %s197 = sadd.s32 %s196, %s18
      $region20: #{encdec_forward.24} parent=15 // pred_fallthru
        _
      // Predicated region
      $region21: #{encdec_forward.24} parent=15 // pred_check
        %p198 = pneg %p76
      $region22: #{encdec_forward.24} parent=15 // pred_check_branch
        %200 = sbr.rel (%p198) target = $region24
      $region23: #{encdec_forward.24} parent=15 // pred_region
        %s201 = smul.u32 %s17, 4
        %s202 = sadd.s32 %s201, %s18
        %p203 = scmp.lt.s32.totalorder %s202, 7
        %s204 = scalar_select %p203, %s202, 7
        %s205 = smul.addr %s204, 8
        %s206 = scalar_lea.vmem %s1, %s205
        %s207 = smul.u32 %s17, 4
        %s208 = sadd.s32 %s207, %s18
      $region24: #{encdec_forward.24} parent=15 // pred_fallthru
        _
      // Predicated region
      $region25: #{encdec_forward.24} parent=15 // pred_check
        %p209 = pneg %p106
      $region26: #{encdec_forward.24} parent=15 // pred_check_branch
        %211 = sbr.rel (%p209) target = $region28
      $region27: #{encdec_forward.24} parent=15 // pred_region
        %s212 = smul.u32 %s17, 4
        %s213 = sadd.s32 %s212, %s18
        %p214 = scmp.lt.s32.totalorder %s213, 7
        %s215 = scalar_select %p214, %s213, 7
        %s216 = smul.addr %s215, 8
        %s217 = scalar_lea.vmem %s2, %s216
        %s218 = smul.u32 %s17, 4
        %s219 = sadd.s32 %s218, %s18
      $region28: #{encdec_forward.24} parent=15 // pred_fallthru
        _
      // Predicated region
      $region29: #{encdec_forward.24} parent=15 // pred_check
        %p220 = pneg %p132
      $region30: #{encdec_forward.24} parent=15 // pred_check_branch
        %222 = sbr.rel (%p220) target = $region32
      $region31: #{encdec_forward.24} parent=15 // pred_region
        %p223 = scmp.lt.s32.totalorder %s17, 1
        %s224 = scalar_select %p223, %s17, 1
        %s225 = smul.addr %s224, 8
        %s226 = scalar_lea.vmem %s3, %s225
      $region32: #{encdec_forward.24} parent=15 // pred_fallthru
        _
    $region16: #{encdec_forward.24} parent=5 // pred_fallthru
      _
    %p227 = scmp.le.s32.totalorder 1, %s10
    %p228 = scmp.lt.s32.totalorder %s10, 9
    %p229 = pnand %p227, %p228
    %p230 = pneg %p229
    // Predicated region
    $region33: #{encdec_forward.24} parent=5 // pred_check
      _
    $region34: #{encdec_forward.24} parent=5 // pred_check_branch
      %232 = sbr.rel (%p229) target = $region36
    $region35: #{encdec_forward.24} parent=5 // pred_region
      %s233 = ssub.s32 %s10, 1
      %s234 = smul.u32 %s19, 4
      %s235 = sadd.s32 %s234, %s20
      %p236 = scmp.lt.s32.totalorder %s235, 7
      %s237 = scalar_select %p236, %s235, 7
      %s238 = smul.addr %s237, 8
      %s239 = scalar_lea.vmem %s0, %s238
      %p240 = pneg %p52
      %p241 = pneg %p49
      %s242 = smul.u32 %s19, 4
      %s243 = sadd.s32 %s242, %s20
      %p244 = scmp.lt.s32.totalorder %s243, 7
      %s245 = scalar_select %p244, %s243, 7
      %s246 = smul.addr %s245, 8
      %s247 = scalar_lea.vmem %s1, %s246
      %p248 = pneg %p82
      %p249 = pneg %p79
      %s250 = smul.u32 %s19, 4
      %s251 = sadd.s32 %s250, %s20
      %p252 = scmp.lt.s32.totalorder %s251, 7
      %s253 = scalar_select %p252, %s251, 7
      %s254 = smul.addr %s253, 8
      %s255 = scalar_lea.vmem %s2, %s254
      %p256 = pneg %p112
      %p257 = pneg %p109
      %p258 = scmp.lt.s32.totalorder %s19, 1
      %s259 = scalar_select %p258, %s19, 1
      %s260 = smul.addr %s259, 8
      %s261 = scalar_lea.vmem %s3, %s260
      %p262 = pneg %p138
      %p263 = pneg %p135
      %p264 = pneg %p168
      %p265 = pneg %p165
      %s266 = smul.u32 %s19, 4
      %s267 = sadd.s32 %s266, %s20
      %p268 = scmp.lt.s32.totalorder %s267, 7
      %s269 = scalar_select %p268, %s267, 7
      %s270 = smul.addr %s269, 8
      %s271 = scalar_lea.vmem %s4, %s270
      %s272 = smul.u32 %s19, 4
      %s273 = sadd.s32 %s272, %s20
      %p274 = scmp.lt.s32.totalorder %s273, 7
      %s275 = scalar_select %p274, %s273, 7
      %s276 = smul.addr %s275, 8
      %s277 = scalar_lea.vmem %s0, %s276
      %s278 = smul.u32 %s19, 4
      %s279 = sadd.s32 %s278, %s20
      %s280 = smul.u32 %s19, 4
      %s281 = sadd.s32 %s280, %s20
      %p282 = scmp.lt.s32.totalorder %s281, 7
      %s283 = scalar_select %p282, %s281, 7
      %s284 = smul.addr %s283, 8
      %s285 = scalar_lea.vmem %s1, %s284
      %s286 = smul.u32 %s19, 4
      %s287 = sadd.s32 %s286, %s20
      %s288 = smul.u32 %s19, 4
      %s289 = sadd.s32 %s288, %s20
      %p290 = scmp.lt.s32.totalorder %s289, 7
      %s291 = scalar_select %p290, %s289, 7
      %s292 = smul.addr %s291, 8
      %s293 = scalar_lea.vmem %s2, %s292
      %s294 = smul.u32 %s19, 4
      %s295 = sadd.s32 %s294, %s20
      %p296 = scmp.lt.s32.totalorder %s19, 1
      %s297 = scalar_select %p296, %s19, 1
      %s298 = smul.addr %s297, 8
      %s299 = scalar_lea.vmem %s3, %s298
      %s300 = smul.u32 %s19, 4
      %s301 = sadd.s32 %s300, %s20
      %p302 = scmp.lt.s32.totalorder %s301, 7
      %s303 = scalar_select %p302, %s301, 7
      %s304 = smul.addr %s303, 8
      %s305 = scalar_lea.vmem %s4, %s304
      %s306 = smul.u32 %s19, 4
      %s307 = sadd.s32 %s306, %s20
      %v309 = vld [vmem:[%s277] sm:$0xff]
      %v310 = vpack.c.bf16 %v309, %v309
      %v311 = vld [vmem:[%s285] sm:$0xff]
      %v312 = vpack.c.bf16 %v311, %v311
      %vm313 = vcmask 64512
      %v315 = vsel %vm313, %v310, 0
      %v318 = vsel %vm313, %v312, 0
      %320 = vmatpush.bf16.xpose.msra.mxu0 0
      %321 = vmatpush.bf16.xpose.msra.mxu0 0
      %322 = vmatpush.bf16.xpose.msra.mxu0 0
      %323 = vmatpush.bf16.xpose.msra.mxu0 0
      %324 = vmatpush.bf16.xpose.msra.mxu0 0
      %325 = vmatpush.bf16.xpose.msra.mxu0 0
      %326 = vmatpush.bf16.xpose.msra.mxu0 0
      %327 = vmatpush.bf16.xpose.msra.mxu0 %v318
      %328 = vmatmul.bf16.gmra.mxu0 %v315
      %v329 = vpop.f32.mrf.mxu0
      %v330 = vadd.f32 0.0, %v329
      %v331 = vpop.f32.mrf.mxu0
      %332 = vdwg.mxu0
      %v333 = vmul.f32 %v330, 0.35355338
      %v334 = vld [vmem:[%s299] sm:$0xff]
      %vm335 = vcmp.eq.f32.partialorder %v334, 0.0
      %v336 = vsel %vm335, -1e+30, %v333
      %v337 = vsel %vm313, %v336, -inf
      %338 = vmax.xlane.f32.xlu0 %v337
      %v339 = vpop.xlane.xlu0 %338
      %v340 = vsub.f32 %v336, %v339
      %v341 = vmul.f32 %v340, 1.442695
      %v342 = vpow.pop %v341
      %v343 = vsel %vm313, %v342, 0.0
      %344 = vadd.xlane.f32.xlu0 %v343
      %v345 = vpop.xlane.xlu0 %344
      %v346 = vrcp.pop %v345
      %v347 = vmul.f32 %v342, %v346
      %v348 = vpack.c.bf16 %v347, %v347
      %v349 = vld [vmem:[%s293] sm:$0xff]
      %v350 = vpack.c.bf16 %v349, %v349
      %v352 = vsel %vm313, %v348, 0
      %vm354 = vcmask 1043456
      %v356 = vsel %vm354, %v350, 0
      %358 = vmatpush.bf16.msra.mxu0 0
      %359 = vmatpush.bf16.msra.mxu0 0
      %360 = vmatpush.bf16.msra.mxu0 0
      %361 = vmatpush.bf16.msra.mxu0 0
      %362 = vmatpush.bf16.msra.mxu0 0
      %363 = vmatpush.bf16.msra.mxu0 0
      %364 = vmatpush.bf16.msra.mxu0 0
      %365 = vmatpush.bf16.msra.mxu0 %v356
      %366 = vmatmul.bf16.gmra.mxu0 %v352
      %v367 = vpop.f32.mrf.mxu0
      %v368 = vadd.f32 0.0, %v367
      %v369 = vpop.f32.mrf.mxu0
      %370 = vdwg.mxu0
      %371 = vst.msk [vmem:[%s305] sm:$0xff] %vm313, %v368
      %s372 = smul.u32 %s19, 4
      %s373 = sadd.s32 %s372, %s20
      %p374 = scmp.lt.s32.totalorder %s373, 7
      %s375 = scalar_select %p374, %s373, 7
      %s376 = smul.addr %s375, 8
      %s377 = scalar_lea.vmem %s4, %s376
      // Predicated region
      $region37: #{encdec_forward.24} parent=35 // pred_check
        %p378 = pneg %p165
      $region38: #{encdec_forward.24} parent=35 // pred_check_branch
        %380 = sbr.rel (%p378) target = $region40
      $region39: #{encdec_forward.24} parent=35 // pred_region
        %s381 = smul.u32 %s19, 4
        %s382 = sadd.s32 %s381, %s20
      $region40: #{encdec_forward.24} parent=35 // pred_fallthru
        _
    $region36: #{encdec_forward.24} parent=5 // pred_fallthru
      _
    %p383 = scmp.le.s32.totalorder 2, %s10
    // Predicated region
    $region41: #{encdec_forward.24} parent=5 // pred_check
      %p384 = pneg %p383
    $region42: #{encdec_forward.24} parent=5 // pred_check_branch
      %386 = sbr.rel (%p384) target = $region44
    $region43: #{encdec_forward.24} parent=5 // pred_region
      %s387 = ssub.s32 %s10, 2
      // Predicated region
      $region45: #{encdec_forward.24} parent=43 // pred_check
        %p388 = pneg %p171
      $region46: #{encdec_forward.24} parent=43 // pred_check_branch
        %390 = sbr.rel (%p388) target = $region48
      $region47: #{encdec_forward.24} parent=43 // pred_region
        %s391 = smul.u32 %s21, 4
        %s392 = sadd.s32 %s391, %s22
        %p393 = scmp.lt.s32.totalorder %s392, 7
        %s394 = scalar_select %p393, %s392, 7
        %s395 = smul.addr %s394, 8
        %s396 = scalar_lea.vmem %s4, %s395
      $region48: #{encdec_forward.24} parent=43 // pred_fallthru
        _
    $region44: #{encdec_forward.24} parent=5 // pred_fallthru
      _
  $region6: #{encdec_forward.24} parent=0 // loop_footer
    %s14 = sadd.s32 1, %s10
  $region7: #{encdec_forward.24} parent=0 // loop_footer_branch
    %9 = sbr.rel target = $region3
  $region8: #{encdec_forward.24} parent=0 // loop_exit
    _

// kernel: encdec_forward.23
$region0: #{encdec_forward.23}
  #allocation0 [shape = 'u32[]', space=smem, size = 0x4, offset = 0x4, fixed_abs, tag = 'smem constant byte address 0x4 - core index']
  #allocation1 [shape = 'u32[72,128]{1,0:T(1,128)}', space=vmem, size = 0x9000, scoped, tag = 'internal scratch']
  %s0 = inlined_call_operand.vmem [shape: f32[16,32], index: 0, kind: input, shape index: {}]
  %s1 = inlined_call_operand.vmem [shape: f32[32,32], index: 1, kind: input, shape index: {}]
  %s2 = inlined_call_operand.vmem [shape: f32[1,32], index: 2, kind: input, shape index: {}]
  %s3 = inlined_call_operand.vmem [shape: f32[16,32], index: 3, kind: output, shape index: {}]
  %s4 = sld [smem:[#allocation0]]
  $region22: #{encdec_forward.23} parent=0
    _
  %s6 = ssub.s32 1, %s4
  %s7 = scalar_select 0, %s6, %s4
  // Predicated region
  $region2: #{encdec_forward.23} parent=0 // pred_check
    _
  $region3: #{encdec_forward.23} parent=0 // pred_check_branch
    %9 = sbr.rel (0) target = $region5
  $region4: #{encdec_forward.23} parent=0 // pred_region
    _
  $region5: #{encdec_forward.23} parent=0 // pred_fallthru
    _
  // Predicated region
  $region6: #{encdec_forward.23} parent=0 // pred_check
    _
  $region7: #{encdec_forward.23} parent=0 // pred_check_branch
    %11 = sbr.rel (0) target = $region9
  $region8: #{encdec_forward.23} parent=0 // pred_region
    _
  $region9: #{encdec_forward.23} parent=0 // pred_fallthru
    _
  // Predicated region
  $region10: #{encdec_forward.23} parent=0 // pred_check
    _
  $region11: #{encdec_forward.23} parent=0 // pred_check_branch
    %13 = sbr.rel (0) target = $region13
  $region12: #{encdec_forward.23} parent=0 // pred_region
    _
  $region13: #{encdec_forward.23} parent=0 // pred_fallthru
    _
  %v15 = vld [vmem:[%s0] sm:$0xff]
  %v16 = vld [vmem:[%s0 + $0x8] sm:$0xff]
  %v17 = vpack.c.bf16 %v16, %v15
  %v18 = vld [vmem:[%s1] sm:$0xff]
  %v19 = vld [vmem:[%s1 + $0x8] sm:$0xff]
  %v20 = vld [vmem:[%s1 + $0x10] sm:$0xff]
  %v21 = vld [vmem:[%s1 + $0x18] sm:$0xff]
  %v22 = vpack.c.bf16 %v19, %v18
  %v23 = vpack.c.bf16 %v21, %v20
  %v24 = vld [vmem:[%s2] sm:$0x1]
  %v26 = vperm.slane %v24, 0
  %vm28 = vcmask 261120
  %v30 = vsel %vm28, %v17, 0
  %32 = vmatpush.bf16.msra.mxu0 0
  %33 = vmatpush.bf16.msra.mxu0 0
  %34 = vmatpush.bf16.msra.mxu0 0
  %35 = vmatpush.bf16.msra.mxu0 0
  %36 = vmatpush.bf16.msra.mxu0 0
  %37 = vmatpush.bf16.msra.mxu0 0
  %38 = vmatpush.bf16.msra.mxu0 %v23
  %39 = vmatpush.bf16.msra.mxu0 %v22
  %40 = vmatmul.bf16.gmra.mxu0 %v30
  %v41 = vpop.f32.mrf.mxu0
  %v42 = vadd.f32 %v26, %v41
  %v43 = vpop.f32.mrf.mxu0
  %v44 = vadd.f32 %v26, %v43
  %45 = vdwg.mxu0
  %46 = vst.msk [vmem:[%s3] sm:$0xff] %vm28, %v42
  %47 = vst.msk [vmem:[%s3 + $0x8] sm:$0xff] %vm28, %v44
  // Predicated region
  $region14: #{encdec_forward.23} parent=0 // pred_check
    _
  $region15: #{encdec_forward.23} parent=0 // pred_check_branch
    %49 = sbr.rel (0) target = $region17
  $region16: #{encdec_forward.23} parent=0 // pred_region
    _
  $region17: #{encdec_forward.23} parent=0 // pred_fallthru
    _
  // Predicated region
  $region18: #{encdec_forward.23} parent=0 // pred_check
    _
  $region19: #{encdec_forward.23} parent=0 // pred_check_branch
    %51 = sbr.rel (0) target = $region21
  $region20: #{encdec_forward.23} parent=0 // pred_region
    _
  $region21: #{encdec_forward.23} parent=0 // pred_fallthru
    _

// kernel: encdec_forward.25
$region0: #{encdec_forward.25}
  #allocation0 [shape = 'u32[]', space=smem, size = 0x4, offset = 0x4, fixed_abs, tag = 'smem constant byte address 0x4 - core index']
  #allocation1 [shape = 'u32[72,128]{1,0:T(1,128)}', space=vmem, size = 0x9000, scoped, tag = 'internal scratch']
  %s0 = inlined_call_operand.vmem [shape: f32[16,32], index: 0, kind: input, shape index: {}]
  %s1 = inlined_call_operand.vmem [shape: f32[16,32], index: 1, kind: input, shape index: {}]
  %s2 = inlined_call_operand.vmem [shape: f32[32,32], index: 2, kind: input, shape index: {}]
  %s3 = inlined_call_operand.vmem [shape: f32[1,32], index: 3, kind: input, shape index: {}]
  %s4 = inlined_call_operand.vmem [shape: f32[1,32], index: 4, kind: input, shape index: {}]
  %s5 = inlined_call_operand.vmem [shape: f32[1,32], index: 5, kind: input, shape index: {}]
  %s6 = inlined_call_operand.vmem [shape: f32[16,32], index: 6, kind: output, shape index: {}]
  %s7 = sld [smem:[#allocation0]]
  $region34: #{encdec_forward.25} parent=0
    _
  %s9 = ssub.s32 1, %s7
  %s10 = scalar_select 0, %s9, %s7
  // Predicated region
  $region2: #{encdec_forward.25} parent=0 // pred_check
    _
  $region3: #{encdec_forward.25} parent=0 // pred_check_branch
    %12 = sbr.rel (0) target = $region5
  $region4: #{encdec_forward.25} parent=0 // pred_region
    _
  $region5: #{encdec_forward.25} parent=0 // pred_fallthru
    _
  // Predicated region
  $region6: #{encdec_forward.25} parent=0 // pred_check
    _
  $region7: #{encdec_forward.25} parent=0 // pred_check_branch
    %14 = sbr.rel (0) target = $region9
  $region8: #{encdec_forward.25} parent=0 // pred_region
    _
  $region9: #{encdec_forward.25} parent=0 // pred_fallthru
    _
  // Predicated region
  $region10: #{encdec_forward.25} parent=0 // pred_check
    _
  $region11: #{encdec_forward.25} parent=0 // pred_check_branch
    %16 = sbr.rel (0) target = $region13
  $region12: #{encdec_forward.25} parent=0 // pred_region
    _
  $region13: #{encdec_forward.25} parent=0 // pred_fallthru
    _
  // Predicated region
  $region14: #{encdec_forward.25} parent=0 // pred_check
    _
  $region15: #{encdec_forward.25} parent=0 // pred_check_branch
    %18 = sbr.rel (0) target = $region17
  $region16: #{encdec_forward.25} parent=0 // pred_region
    _
  $region17: #{encdec_forward.25} parent=0 // pred_fallthru
    _
  // Predicated region
  $region18: #{encdec_forward.25} parent=0 // pred_check
    _
  $region19: #{encdec_forward.25} parent=0 // pred_check_branch
    %20 = sbr.rel (0) target = $region21
  $region20: #{encdec_forward.25} parent=0 // pred_region
    _
  $region21: #{encdec_forward.25} parent=0 // pred_fallthru
    _
  // Predicated region
  $region22: #{encdec_forward.25} parent=0 // pred_check
    _
  $region23: #{encdec_forward.25} parent=0 // pred_check_branch
    %22 = sbr.rel (0) target = $region25
  $region24: #{encdec_forward.25} parent=0 // pred_region
    _
  $region25: #{encdec_forward.25} parent=0 // pred_fallthru
    _
  %v24 = vld [vmem:[%s1] sm:$0xff]
  %v25 = vld [vmem:[%s1 + $0x8] sm:$0xff]
  %v26 = vpack.c.bf16 %v25, %v24
  %v27 = vld [vmem:[%s2] sm:$0xff]
  %v28 = vld [vmem:[%s2 + $0x8] sm:$0xff]
  %v29 = vld [vmem:[%s2 + $0x10] sm:$0xff]
  %v30 = vld [vmem:[%s2 + $0x18] sm:$0xff]
  %v31 = vpack.c.bf16 %v28, %v27
  %v32 = vpack.c.bf16 %v30, %v29
  %v33 = vld [vmem:[%s3] sm:$0x1]
  %v35 = vperm.slane %v33, 0
  %vm37 = vcmask 261120
  %v39 = vsel %vm37, %v26, 0
  %41 = vmatpush.bf16.msra.mxu0 0
  %42 = vmatpush.bf16.msra.mxu0 0
  %43 = vmatpush.bf16.msra.mxu0 0
  %44 = vmatpush.bf16.msra.mxu0 0
  %45 = vmatpush.bf16.msra.mxu0 0
  %46 = vmatpush.bf16.msra.mxu0 0
  %47 = vmatpush.bf16.msra.mxu0 %v32
  %48 = vmatpush.bf16.msra.mxu0 %v31
  %49 = vmatmul.bf16.gmra.mxu0 %v39
  %v50 = vpop.f32.mrf.mxu0
  %v51 = vadd.f32 %v35, %v50
  %v52 = vpop.f32.mrf.mxu0
  %v53 = vadd.f32 %v35, %v52
  %54 = vdwg.mxu0
  %v55 = vld [vmem:[%s0] sm:$0xff]
  %v56 = vld [vmem:[%s0 + $0x8] sm:$0xff]
  %v57 = vadd.f32 %v55, %v51
  %v58 = vadd.f32 %v56, %v53
  %v59 = vld [vmem:[%s4] sm:$0x1]
  %v60 = vld [vmem:[%s5] sm:$0x1]
  %v61 = vsel %vm37, %v57, 0.0
  %62 = vadd.xlane.f32.xlu0 %v61
  %v63 = vpop.xlane.xlu0 %62
  %v64 = vsel %vm37, %v58, 0.0
  %65 = vadd.xlane.f32.xlu0 %v64
  %v66 = vpop.xlane.xlu0 %65
  %v67 = vrcp.pop 32.0
  %v68 = vmul.f32 32.0, %v67
  %v69 = vsub.f32 1.0, %v68
  %v70 = vmul.f32 %v67, %v69
  %v71 = vadd.f32 %v67, %v70
  %vm72 = vweird.f32 %v67
  %v73 = vsel %vm72, %v67, %v71
  %v74 = vmul.f32 %v63, %v73
  %v75 = vmul.f32 %v66, %v73
  %v76 = vsub.f32 %v57, %v74
  %v77 = vsub.f32 %v58, %v75
  %v78 = vmul.f32 %v76, %v76
  %v79 = vmul.f32 %v77, %v77
  %v80 = vsel %vm37, %v78, 0.0
  %81 = vadd.xlane.f32.xlu0 %v80
  %v82 = vpop.xlane.xlu0 %81
  %v83 = vsel %vm37, %v79, 0.0
  %84 = vadd.xlane.f32.xlu0 %v83
  %v85 = vpop.xlane.xlu0 %84
  %v86 = vmul.f32 %v82, %v73
  %v87 = vmul.f32 %v85, %v73
  %v88 = vadd.f32 %v86, 1e-05
  %v89 = vadd.f32 %v87, 1e-05
  %v90 = vrsqrt.pop %v88
  %v91 = vmul.f32 %v90, %v88
  %v92 = vmul.f32 %v91, %v90
  %v93 = vmul.f32 0.5, %v92
  %v94 = vsub.f32 1.5, %v93
  %v95 = vmul.f32 %v90, %v94
  %vm96 = vweird.f32 %v88
  %vm97 = vweird.f32 %v90
  %vm98 = vmor %vm96, %vm97
  %v99 = vsel %vm98, %v90, %v95
  %v100 = vrsqrt.pop %v89
  %v101 = vmul.f32 %v100, %v89
  %v102 = vmul.f32 %v101, %v100
  %v103 = vmul.f32 0.5, %v102
  %v104 = vsub.f32 1.5, %v103
  %v105 = vmul.f32 %v100, %v104
  %vm106 = vweird.f32 %v89
  %vm107 = vweird.f32 %v100
  %vm108 = vmor %vm106, %vm107
  %v109 = vsel %vm108, %v100, %v105
  %v110 = vmul.f32 %v76, %v99
  %v111 = vmul.f32 %v77, %v109
  %v113 = vperm.slane %v59, 0
  %v115 = vmul.f32 %v110, %v113
  %v116 = vmul.f32 %v111, %v113
  %v118 = vperm.slane %v60, 0
  %v120 = vadd.f32 %v115, %v118
  %v121 = vadd.f32 %v116, %v118
  %122 = vst.msk [vmem:[%s6] sm:$0xff] %vm37, %v120
  %123 = vst.msk [vmem:[%s6 + $0x8] sm:$0xff] %vm37, %v121
  // Predicated region
  $region26: #{encdec_forward.25} parent=0 // pred_check
    _
  $region27: #{encdec_forward.25} parent=0 // pred_check_branch
    %125 = sbr.rel (0) target = $region29
  $region28: #{encdec_forward.25} parent=0 // pred_region
    _
  $region29: #{encdec_forward.25} parent=0 // pred_fallthru
    _
  // Predicated region
  $region30: #{encdec_forward.25} parent=0 // pred_check
    _
  $region31: #{encdec_forward.25} parent=0 // pred_check_branch
    %127 = sbr.rel (0) target = $region33
  $region32: #{encdec_forward.25} parent=0 // pred_region
    _
  $region33: #{encdec_forward.25} parent=0 // pred_fallthru
    _

// kernel: encdec_forward.26
$region0: #{encdec_forward.26}
  #allocation0 [shape = 'u32[]', space=smem, size = 0x4, offset = 0x4, fixed_abs, tag = 'smem constant byte address 0x4 - core index']
  #allocation1 [shape = 'u32[72,128]{1,0:T(1,128)}', space=vmem, size = 0x9000, scoped, tag = 'internal scratch']
  %s0 = inlined_call_operand.vmem [shape: f32[16,32], index: 0, kind: input, shape index: {}]
  %s1 = inlined_call_operand.vmem [shape: f32[32,64], index: 1, kind: input, shape index: {}]
  %s2 = inlined_call_operand.vmem [shape: f32[1,64], index: 2, kind: input, shape index: {}]
  %s3 = inlined_call_operand.vmem [shape: f32[64,32], index: 3, kind: input, shape index: {}]
  %s4 = inlined_call_operand.vmem [shape: f32[1,32], index: 4, kind: input, shape index: {}]
  %s5 = inlined_call_operand.vmem [shape: f32[1,32], index: 5, kind: input, shape index: {}]
  %s6 = inlined_call_operand.vmem [shape: f32[1,32], index: 6, kind: input, shape index: {}]
  %s7 = inlined_call_operand.vmem [shape: f32[16,32], index: 7, kind: output, shape index: {}]
  %s8 = sld [smem:[#allocation0]]
  $region38: #{encdec_forward.26} parent=0
    _
  %s10 = ssub.s32 1, %s8
  %s11 = scalar_select 0, %s10, %s8
  // Predicated region
  $region2: #{encdec_forward.26} parent=0 // pred_check
    _
  $region3: #{encdec_forward.26} parent=0 // pred_check_branch
    %13 = sbr.rel (0) target = $region5
  $region4: #{encdec_forward.26} parent=0 // pred_region
    _
  $region5: #{encdec_forward.26} parent=0 // pred_fallthru
    _
  // Predicated region
  $region6: #{encdec_forward.26} parent=0 // pred_check
    _
  $region7: #{encdec_forward.26} parent=0 // pred_check_branch
    %15 = sbr.rel (0) target = $region9
  $region8: #{encdec_forward.26} parent=0 // pred_region
    _
  $region9: #{encdec_forward.26} parent=0 // pred_fallthru
    _
  // Predicated region
  $region10: #{encdec_forward.26} parent=0 // pred_check
    _
  $region11: #{encdec_forward.26} parent=0 // pred_check_branch
    %17 = sbr.rel (0) target = $region13
  $region12: #{encdec_forward.26} parent=0 // pred_region
    _
  $region13: #{encdec_forward.26} parent=0 // pred_fallthru
    _
  // Predicated region
  $region14: #{encdec_forward.26} parent=0 // pred_check
    _
  $region15: #{encdec_forward.26} parent=0 // pred_check_branch
    %19 = sbr.rel (0) target = $region17
  $region16: #{encdec_forward.26} parent=0 // pred_region
    _
  $region17: #{encdec_forward.26} parent=0 // pred_fallthru
    _
  // Predicated region
  $region18: #{encdec_forward.26} parent=0 // pred_check
    _
  $region19: #{encdec_forward.26} parent=0 // pred_check_branch
    %21 = sbr.rel (0) target = $region21
  $region20: #{encdec_forward.26} parent=0 // pred_region
    _
  $region21: #{encdec_forward.26} parent=0 // pred_fallthru
    _
  // Predicated region
  $region22: #{encdec_forward.26} parent=0 // pred_check
    _
  $region23: #{encdec_forward.26} parent=0 // pred_check_branch
    %23 = sbr.rel (0) target = $region25
  $region24: #{encdec_forward.26} parent=0 // pred_region
    _
  $region25: #{encdec_forward.26} parent=0 // pred_fallthru
    _
  // Predicated region
  $region26: #{encdec_forward.26} parent=0 // pred_check
    _
  $region27: #{encdec_forward.26} parent=0 // pred_check_branch
    %25 = sbr.rel (0) target = $region29
  $region28: #{encdec_forward.26} parent=0 // pred_region
    _
  $region29: #{encdec_forward.26} parent=0 // pred_fallthru
    _
  %v27 = vld [vmem:[%s0] sm:$0xff]
  %v28 = vld [vmem:[%s0 + $0x8] sm:$0xff]
  %v29 = vpack.c.bf16 %v28, %v27
  %v30 = vld [vmem:[%s1] sm:$0xff]
  %v31 = vld [vmem:[%s1 + $0x8] sm:$0xff]
  %v32 = vld [vmem:[%s1 + $0x10] sm:$0xff]
  %v33 = vld [vmem:[%s1 + $0x18] sm:$0xff]
  %v34 = vpack.c.bf16 %v31, %v30
  %v35 = vpack.c.bf16 %v33, %v32
  %v36 = vld [vmem:[%s2] sm:$0x1]
  %v38 = vperm.slane %v36, 0
  %vm40 = vcmask 261120
  %v42 = vsel %vm40, %v29, 0
  %44 = vmatpush.bf16.msra.mxu0 0
  %45 = vmatpush.bf16.msra.mxu0 0
  %46 = vmatpush.bf16.msra.mxu0 0
  %47 = vmatpush.bf16.msra.mxu0 0
  %48 = vmatpush.bf16.msra.mxu0 0
  %49 = vmatpush.bf16.msra.mxu0 0
  %50 = vmatpush.bf16.msra.mxu0 %v35
  %51 = vmatpush.bf16.msra.mxu0 %v34
  %52 = vmatmul.bf16.gmra.mxu0 %v42
  %v53 = vpop.f32.mrf.mxu0
  %v54 = vadd.f32 %v38, %v53
  %v55 = vpop.f32.mrf.mxu0
  %v56 = vadd.f32 %v38, %v55
  %57 = vdwg.mxu0
  %v58 = vmax.f32 %v54, 0.0
  %v59 = vmax.f32 %v56, 0.0
  %v60 = vpack.c.bf16 %v59, %v58
  %v61 = vld [vmem:[%s3] sm:$0xff]
  %v62 = vld [vmem:[%s3 + $0x8] sm:$0xff]
  %v63 = vld [vmem:[%s3 + $0x10] sm:$0xff]
  %v64 = vld [vmem:[%s3 + $0x18] sm:$0xff]
  %v65 = vld [vmem:[%s3 + $0x20] sm:$0xff]
  %v66 = vld [vmem:[%s3 + $0x28] sm:$0xff]
  %v67 = vld [vmem:[%s3 + $0x30] sm:$0xff]
  %v68 = vld [vmem:[%s3 + $0x38] sm:$0xff]
  %v69 = vpack.c.bf16 %v62, %v61
  %v70 = vpack.c.bf16 %v64, %v63
  %v71 = vpack.c.bf16 %v66, %v65
  %v72 = vpack.c.bf16 %v68, %v67
  %v73 = vld [vmem:[%s4] sm:$0x1]
  %v75 = vperm.slane %v73, 0
  %vm77 = vcmask 523264
  %v79 = vsel %vm77, %v60, 0
  %81 = vmatpush.bf16.msra.mxu0 0
  %82 = vmatpush.bf16.msra.mxu0 0
  %83 = vmatpush.bf16.msra.mxu0 0
  %84 = vmatpush.bf16.msra.mxu0 0
  %85 = vmatpush.bf16.msra.mxu0 %v72
  %86 = vmatpush.bf16.msra.mxu0 %v71
  %87 = vmatpush.bf16.msra.mxu0 %v70
  %88 = vmatpush.bf16.msra.mxu0 %v69
  %89 = vmatmul.bf16.gmra.mxu0 %v79
  %v90 = vpop.f32.mrf.mxu0
  %v91 = vadd.f32 %v75, %v90
  %v92 = vpop.f32.mrf.mxu0
  %v93 = vadd.f32 %v75, %v92
  %94 = vdwg.mxu0
  %v95 = vadd.f32 %v27, %v91
  %v96 = vadd.f32 %v28, %v93
  %v97 = vld [vmem:[%s5] sm:$0x1]
  %v98 = vld [vmem:[%s6] sm:$0x1]
  %v99 = vsel %vm40, %v95, 0.0
  %100 = vadd.xlane.f32.xlu0 %v99
  %v101 = vpop.xlane.xlu0 %100
  %v102 = vsel %vm40, %v96, 0.0
  %103 = vadd.xlane.f32.xlu0 %v102
  %v104 = vpop.xlane.xlu0 %103
  %v105 = vrcp.pop 32.0
  %v106 = vmul.f32 32.0, %v105
  %v107 = vsub.f32 1.0, %v106
  %v108 = vmul.f32 %v105, %v107
  %v109 = vadd.f32 %v105, %v108
  %vm110 = vweird.f32 %v105
  %v111 = vsel %vm110, %v105, %v109
  %v112 = vmul.f32 %v101, %v111
  %v113 = vmul.f32 %v104, %v111
  %v114 = vsub.f32 %v95, %v112
  %v115 = vsub.f32 %v96, %v113
  %v116 = vmul.f32 %v114, %v114
  %v117 = vmul.f32 %v115, %v115
  %v118 = vsel %vm40, %v116, 0.0
  %119 = vadd.xlane.f32.xlu0 %v118
  %v120 = vpop.xlane.xlu0 %119
  %v121 = vsel %vm40, %v117, 0.0
  %122 = vadd.xlane.f32.xlu0 %v121
  %v123 = vpop.xlane.xlu0 %122
  %v124 = vmul.f32 %v120, %v111
  %v125 = vmul.f32 %v123, %v111
  %v126 = vadd.f32 %v124, 1e-05
  %v127 = vadd.f32 %v125, 1e-05
  %v128 = vrsqrt.pop %v126
  %v129 = vmul.f32 %v128, %v126
  %v130 = vmul.f32 %v129, %v128
  %v131 = vmul.f32 0.5, %v130
  %v132 = vsub.f32 1.5, %v131
  %v133 = vmul.f32 %v128, %v132
  %vm134 = vweird.f32 %v126
  %vm135 = vweird.f32 %v128
  %vm136 = vmor %vm134, %vm135
  %v137 = vsel %vm136, %v128, %v133
  %v138 = vrsqrt.pop %v127
  %v139 = vmul.f32 %v138, %v127
  %v140 = vmul.f32 %v139, %v138
  %v141 = vmul.f32 0.5, %v140
  %v142 = vsub.f32 1.5, %v141
  %v143 = vmul.f32 %v138, %v142
  %vm144 = vweird.f32 %v127
  %vm145 = vweird.f32 %v138
  %vm146 = vmor %vm144, %vm145
  %v147 = vsel %vm146, %v138, %v143
  %v148 = vmul.f32 %v114, %v137
  %v149 = vmul.f32 %v115, %v147
  %v151 = vperm.slane %v97, 0
  %v153 = vmul.f32 %v148, %v151
  %v154 = vmul.f32 %v149, %v151
  %v156 = vperm.slane %v98, 0
  %v158 = vadd.f32 %v153, %v156
  %v159 = vadd.f32 %v154, %v156
  %160 = vst.msk [vmem:[%s7] sm:$0xff] %vm40, %v158
  %161 = vst.msk [vmem:[%s7 + $0x8] sm:$0xff] %vm40, %v159
  // Predicated region
  $region30: #{encdec_forward.26} parent=0 // pred_check
    _
  $region31: #{encdec_forward.26} parent=0 // pred_check_branch
    %163 = sbr.rel (0) target = $region33
  $region32: #{encdec_forward.26} parent=0 // pred_region
    _
  $region33: #{encdec_forward.26} parent=0 // pred_fallthru
    _
  // Predicated region
  $region34: #{encdec_forward.26} parent=0 // pred_check
    _
  $region35: #{encdec_forward.26} parent=0 // pred_check_branch
    %165 = sbr.rel (0) target = $region37
  $region36: #{encdec_forward.26} parent=0 // pred_region
    _
  $region37: #{encdec_forward.26} parent=0 // pred_fallthru
    _

// kernel: encdec_forward.45
$region0: #{encdec_forward.45}
  #allocation0 [shape = 'u32[]', space=smem, size = 0x4, offset = 0x4, fixed_abs, tag = 'smem constant byte address 0x4 - core index']
  #allocation1 [shape = 'u32[72,128]{1,0:T(1,128)}', space=vmem, size = 0x9000, scoped, tag = 'internal scratch']
  %s0 = inlined_call_operand.vmem [shape: f32[16,32], index: 0, kind: input, shape index: {}]
  %s1 = inlined_call_operand.vmem [shape: f32[32,50], index: 1, kind: input, shape index: {}]
  %s2 = inlined_call_operand.vmem [shape: f32[1,50], index: 2, kind: input, shape index: {}]
  %s3 = inlined_call_operand.hbm [shape: f32[16,50], index: 3, kind: output, shape index: {}]
  %s4 = sld [smem:[#allocation0]]
  $region22: #{encdec_forward.45} parent=0
    _
  %s6 = ssub.s32 1, %s4
  %s7 = scalar_select 0, %s6, %s4
  $region1: #{encdec_forward.45} parent=0
    #allocation2 [shape = 'u8[8192]{0}', space=vmem, size = 0x2000, scoped, tag = 'output window, operand 0, single buffered']
    #allocation3 [shape = 's32[1]{0}', space=sflag, size = 0x4, scoped, tag = 'scoped memory for encdec_forward.45']
    %8 = vsyncpa [#allocation3], 0
    // Predicated region
    $region2: #{encdec_forward.45} parent=1 // pred_check
      _
    $region3: #{encdec_forward.45} parent=1 // pred_check_branch
      %10 = sbr.rel (0) target = $region5
    $region4: #{encdec_forward.45} parent=1 // pred_region
      _
    $region5: #{encdec_forward.45} parent=1 // pred_fallthru
      _
    // Predicated region
    $region6: #{encdec_forward.45} parent=1 // pred_check
      _
    $region7: #{encdec_forward.45} parent=1 // pred_check_branch
      %12 = sbr.rel (0) target = $region9
    $region8: #{encdec_forward.45} parent=1 // pred_region
      _
    $region9: #{encdec_forward.45} parent=1 // pred_fallthru
      _
    // Predicated region
    $region10: #{encdec_forward.45} parent=1 // pred_check
      _
    $region11: #{encdec_forward.45} parent=1 // pred_check_branch
      %14 = sbr.rel (0) target = $region13
    $region12: #{encdec_forward.45} parent=1 // pred_region
      _
    $region13: #{encdec_forward.45} parent=1 // pred_fallthru
      _
    %v16 = vld [vmem:[%s0] sm:$0xff]
    %v17 = vld [vmem:[%s0 + $0x8] sm:$0xff]
    %v18 = vpack.c.bf16 %v17, %v16
    %v19 = vld [vmem:[%s1] sm:$0xff]
    %v20 = vld [vmem:[%s1 + $0x8] sm:$0xff]
    %v21 = vld [vmem:[%s1 + $0x10] sm:$0xff]
    %v22 = vld [vmem:[%s1 + $0x18] sm:$0xff]
    %v23 = vpack.c.bf16 %v20, %v19
    %v24 = vpack.c.bf16 %v22, %v21
    %v25 = vld [vmem:[%s2] sm:$0x1]
    %v27 = vperm.slane %v25, 0
    %vm29 = vcmask 261120
    %v31 = vsel %vm29, %v18, 0
    %33 = vmatpush.bf16.msra.mxu0 0
    %34 = vmatpush.bf16.msra.mxu0 0
    %35 = vmatpush.bf16.msra.mxu0 0
    %36 = vmatpush.bf16.msra.mxu0 0
    %37 = vmatpush.bf16.msra.mxu0 0
    %38 = vmatpush.bf16.msra.mxu0 0
    %39 = vmatpush.bf16.msra.mxu0 %v24
    %40 = vmatpush.bf16.msra.mxu0 %v23
    %41 = vmatmul.bf16.gmra.mxu0 %v31
    %v42 = vpop.f32.mrf.mxu0
    %v43 = vadd.f32 %v27, %v42
    %v44 = vpop.f32.mrf.mxu0
    %v45 = vadd.f32 %v27, %v44
    %46 = vdwg.mxu0
    %vm47 = vcmask 408576
    %v48 = vsel %vm47, %v43, -inf
    %49 = vmax.xlane.f32.xlu0 %v48
    %v50 = vpop.xlane.xlu0 %49
    %v51 = vsel %vm47, %v45, -inf
    %52 = vmax.xlane.f32.xlu0 %v51
    %v53 = vpop.xlane.xlu0 %52
    %v54 = vsub.f32 %v43, %v50
    %v55 = vsub.f32 %v45, %v53
    %v56 = vmul.f32 %v54, 1.442695
    %v57 = vpow.pop %v56
    %v58 = vmul.f32 %v55, 1.442695
    %v59 = vpow.pop %v58
    %v60 = vsel %vm47, %v57, 0.0
    %61 = vadd.xlane.f32.xlu0 %v60
    %v62 = vpop.xlane.xlu0 %61
    %v63 = vsel %vm47, %v59, 0.0
    %64 = vadd.xlane.f32.xlu0 %v63
    %v65 = vpop.xlane.xlu0 %64
    %v66 = vrcp.pop %v62
    %v67 = vmul.f32 %v62, %v66
    %v68 = vsub.f32 1.0, %v67
    %v69 = vmul.f32 %v66, %v68
    %v70 = vadd.f32 %v66, %v69
    %vm71 = vweird.f32 %v62
    %vm72 = vweird.f32 %v66
    %vm73 = vmor %vm71, %vm72
    %v74 = vsel %vm73, %v66, %v70
    %v75 = vand.u32 2147483647, %v62
    %vm76 = vcmp.eq.f32.partialorder %v75, 8.507059e+37
    %v77 = vand.u32 %v62, 2147483648
    %v78 = vor.u32 1.1754944e-38, %v77
    %v79 = vsel %vm76, %v78, %v74
    %v80 = vmul.f32 %v57, %v79
    %v81 = vrcp.pop %v65
    %v82 = vmul.f32 %v65, %v81
    %v83 = vsub.f32 1.0, %v82
    %v84 = vmul.f32 %v81, %v83
    %v85 = vadd.f32 %v81, %v84
    %vm86 = vweird.f32 %v65
    %vm87 = vweird.f32 %v81
    %vm88 = vmor %vm86, %vm87
    %v89 = vsel %vm88, %v81, %v85
    %v90 = vand.u32 2147483647, %v65
    %vm91 = vcmp.eq.f32.partialorder %v90, 8.507059e+37
    %v92 = vand.u32 %v65, 2147483648
    %v93 = vor.u32 1.1754944e-38, %v92
    %v94 = vsel %vm91, %v93, %v89
    %v95 = vmul.f32 %v59, %v94
    %96 = vst.msk [vmem:[#allocation2] sm:$0xff] %vm47, %v80
    %97 = vst.msk [vmem:[#allocation2 + $0x8] sm:$0xff] %vm47, %v95
    // Predicated region
    $region14: #{encdec_forward.45} parent=1 // pred_check
      _
    $region15: #{encdec_forward.45} parent=1 // pred_check_branch
      %99 = sbr.rel (0) target = $region17
    $region16: #{encdec_forward.45} parent=1 // pred_region
      %101 = vsyncadd [#allocation3], 0
      %s102 = sshll.u32 [#allocation2], 4
      %s103 = int_to_ptr.vmem [resolvable:$true] %s102
      %s104 = sshll.u32 %s3, 4
      %s105 = int_to_ptr.hbm [resolvable:$true] %s104
      %110 = dma.vmem_to_hbm [thread:$0]  %s103, 256, %s105, [#allocation3], 128, 128, 8
    $region17: #{encdec_forward.45} parent=1 // pred_fallthru
      _
    // Predicated region
    $region18: #{encdec_forward.45} parent=1 // pred_check
      _
    $region19: #{encdec_forward.45} parent=1 // pred_check_branch
      %112 = sbr.rel (0) target = $region21
    $region20: #{encdec_forward.45} parent=1 // pred_region
      %114 = dma.done [#allocation3], 256
    $region21: #{encdec_forward.45} parent=1 // pred_fallthru
      _
    %115 = vsyncpa [#allocation3], 1

// kernel: encdec_forward.34
$region0: #{encdec_forward.34}
  #allocation0 [shape = 'u32[]', space=smem, size = 0x4, offset = 0x4, fixed_abs, tag = 'smem constant byte address 0x4 - core index']
  #allocation1 [shape = 'u32[72,128]{1,0:T(1,128)}', space=vmem, size = 0x9000, scoped, tag = 'internal scratch']
  %s0 = inlined_call_operand.vmem [shape: f32[32,32], index: 0, kind: input, shape index: {}]
  %s1 = inlined_call_operand.vmem [shape: f32[32,32], index: 1, kind: input, shape index: {}]
  %s2 = inlined_call_operand.vmem [shape: f32[1,32], index: 2, kind: input, shape index: {}]
  %s3 = inlined_call_operand.vmem [shape: f32[32,32], index: 3, kind: output, shape index: {}]
  %s4 = sld [smem:[#allocation0]]
  $region22: #{encdec_forward.34} parent=0
    _
  %s6 = ssub.s32 1, %s4
  %s7 = scalar_select 0, %s6, %s4
  // Predicated region
  $region2: #{encdec_forward.34} parent=0 // pred_check
    _
  $region3: #{encdec_forward.34} parent=0 // pred_check_branch
    %9 = sbr.rel (0) target = $region5
  $region4: #{encdec_forward.34} parent=0 // pred_region
    _
  $region5: #{encdec_forward.34} parent=0 // pred_fallthru
    _
  // Predicated region
  $region6: #{encdec_forward.34} parent=0 // pred_check
    _
  $region7: #{encdec_forward.34} parent=0 // pred_check_branch
    %11 = sbr.rel (0) target = $region9
  $region8: #{encdec_forward.34} parent=0 // pred_region
    _
  $region9: #{encdec_forward.34} parent=0 // pred_fallthru
    _
  // Predicated region
  $region10: #{encdec_forward.34} parent=0 // pred_check
    _
  $region11: #{encdec_forward.34} parent=0 // pred_check_branch
    %13 = sbr.rel (0) target = $region13
  $region12: #{encdec_forward.34} parent=0 // pred_region
    _
  $region13: #{encdec_forward.34} parent=0 // pred_fallthru
    _
  %v15 = vld [vmem:[%s0] sm:$0xff]
  %v16 = vld [vmem:[%s0 + $0x8] sm:$0xff]
  %v17 = vld [vmem:[%s0 + $0x10] sm:$0xff]
  %v18 = vld [vmem:[%s0 + $0x18] sm:$0xff]
  %v19 = vpack.c.bf16 %v16, %v15
  %v20 = vpack.c.bf16 %v18, %v17
  %v21 = vld [vmem:[%s1] sm:$0xff]
  %v22 = vld [vmem:[%s1 + $0x8] sm:$0xff]
  %v23 = vld [vmem:[%s1 + $0x10] sm:$0xff]
  %v24 = vld [vmem:[%s1 + $0x18] sm:$0xff]
  %v25 = vpack.c.bf16 %v22, %v21
  %v26 = vpack.c.bf16 %v24, %v23
  %v27 = vld [vmem:[%s2] sm:$0x1]
  %v29 = vperm.slane %v27, 0
  %vm31 = vcmask 261120
  %v33 = vsel %vm31, %v19, 0
  %v36 = vsel %vm31, %v20, 0
  %38 = vmatpush.bf16.msra.mxu0 0
  %39 = vmatpush.bf16.msra.mxu0 0
  %40 = vmatpush.bf16.msra.mxu0 0
  %41 = vmatpush.bf16.msra.mxu0 0
  %42 = vmatpush.bf16.msra.mxu0 0
  %43 = vmatpush.bf16.msra.mxu0 0
  %44 = vmatpush.bf16.msra.mxu0 %v26
  %45 = vmatpush.bf16.msra.mxu0 %v25
  %46 = vmatmul.bf16.gmra.mxu0 %v33
  %v47 = vpop.f32.mrf.mxu0
  %v48 = vadd.f32 %v29, %v47
  %v49 = vpop.f32.mrf.mxu0
  %v50 = vadd.f32 %v29, %v49
  %51 = vmatmul.bf16.gmra.mxu0 %v36
  %v52 = vpop.f32.mrf.mxu0
  %v53 = vadd.f32 %v29, %v52
  %v54 = vpop.f32.mrf.mxu0
  %v55 = vadd.f32 %v29, %v54
  %56 = vdwg.mxu0
  %57 = vst.msk [vmem:[%s3] sm:$0xff] %vm31, %v48
  %58 = vst.msk [vmem:[%s3 + $0x8] sm:$0xff] %vm31, %v50
  %59 = vst.msk [vmem:[%s3 + $0x10] sm:$0xff] %vm31, %v53
  %60 = vst.msk [vmem:[%s3 + $0x18] sm:$0xff] %vm31, %v55
  // Predicated region
  $region14: #{encdec_forward.34} parent=0 // pred_check
    _
  $region15: #{encdec_forward.34} parent=0 // pred_check_branch
    %62 = sbr.rel (0) target = $region17
  $region16: #{encdec_forward.34} parent=0 // pred_region
    _
  $region17: #{encdec_forward.34} parent=0 // pred_fallthru
    _
  // Predicated region
  $region18: #{encdec_forward.34} parent=0 // pred_check
    _
  $region19: #{encdec_forward.34} parent=0 // pred_check_branch
    %64 = sbr.rel (0) target = $region21
  $region20: #{encdec_forward.34} parent=0 // pred_region
    _
  $region21: #{encdec_forward.34} parent=0 // pred_fallthru
    _

</llo_original>
